<compile_context>
chip_gen: v7x
topology: tpu7x:2x2x1
jax: 0.10.0
libtpu: 0.0.40
codegen_flags: <defaults>
</compile_context>

<pallas_src>
import jax
import jax.numpy as jnp
from jax.experimental import pallas as pl
from jax.experimental.pallas import tpu as pltpu


_ONEHOT_MAX_ROWS = 2048              # one-hot is (bt, V); keep V modest
_FAST_PATH_MAX_TABLE_BYTES = 16 << 20  # v7x-safe VMEM budget for the table
_MAX_DMA_DESCRIPTORS = 128           # HBM path: cap bt*F DMAs per grid step


def _pick_batch_tile(batch, num_fields, *, max_tile=128, max_desc=None):
    """Pick the batch tile bt.

    Prefers a multiple of 8 (dense (8,128) sublane tiles) that divides `batch`,
    gives >= 2 grid steps (so the "parallel" batch axis can shard across v7x's
    two TensorCores) and -- for the HBM-gather path -- keeps bt * num_fields
    below the DMA-descriptor cap.  Falls back to the full batch (single grid
    step), which is always a legal BlockSpec.
    """
    for cand in (128, 64, 32, 16, 8):
        if cand > max_tile or cand >= batch:
            continue
        if batch % cand:
            continue
        if max_desc is not None and cand * num_fields > max_desc:
            continue
        return cand
    return batch


def _tf_embedding_onehot_kernel(idx_ref, table_ref, out_ref):
    """Small-vocab fast path: table resident in VMEM, gather via one-hot MXU.

    idx_ref  : (bt, F) int32 VMEM -- global row ids into the concatenated table
    table_ref: (V_total, E) VMEM  -- full table block, resident across the grid
    out_ref  : (bt, F*E)    VMEM  -- lane-dense output block
    """
    bt, num_fields = idx_ref.shape
    v_total, _ = table_ref.shape

    idx = idx_ref[...]                       # (bt, F)
    table = table_ref[...]                   # (V, E)
    iota_v = jax.lax.broadcasted_iota(jnp.int32, (bt, v_total), 1)

    pieces = []
    for f in range(num_fields):              # F is small -> static unroll
        onehot = (iota_v == idx[:, f][:, None]).astype(table.dtype)   # (bt, V)
        # One-hot x table is an exact row-select (0/1 weights, f32 accumulate).
        pieces.append(
            jnp.dot(onehot, table,
                    preferred_element_type=jnp.float32,
                    precision=jax.lax.Precision.HIGHEST))
    # Single dense (bt, F*E) store: unmasked vst when F*E is a multiple of 128.
    out_ref[...] = jnp.concatenate(pieces, axis=-1).astype(out_ref.dtype)


def _tf_embedding_hbm_gather_kernel(idx_ref, table_ref, out_ref, gather_buf, sem):
    """Large-vocab fallback: one small HBM DMA per (batch row, field).

    idx_ref   : (F, B) int32 in SMEM (scalar prefetch), field-major
    table_ref : (V_total, E) in HBM (memory_space=pl.ANY)
    out_ref   : (bt, F*E) VMEM output block (lane-dense)
    gather_buf: (F, bt, E) VMEM scratch the row DMAs land in
    sem       : (1,) shared DMA-completion semaphore
    """
    num_fields = idx_ref.shape[0]
    bt = out_ref.shape[0]
    b0 = pl.program_id(0) * bt

    copies = []
    for f in range(num_fields):              # static unroll; bt*F <= _MAX_DMA_DESCRIPTORS
        for bl in range(bt):
            row = idx_ref[f, b0 + bl]        # dynamic scalar read from SMEM
            cp = pltpu.make_async_copy(
                table_ref.at[pl.ds(row, 1), :],        # (1, E) HBM row
                gather_buf.at[f, pl.ds(bl, 1), :],     # (1, E) VMEM slot
                sem.at[0])                             # shared semaphore
            cp.start()
            copies.append(cp)
    for cp in copies:                        # each wait consumes its own bytes
        cp.wait()

    # Re-pack (F, bt, E) -> lane-dense (bt, F*E) so the block writeback is a
    # dense store instead of masked (F, E) partial stores.
    out_ref[...] = jnp.concatenate(
        [gather_buf[f] for f in range(num_fields)], axis=-1).astype(out_ref.dtype)


def tf_embedding(x, table_cat, field_offsets, field_num, *, force_hbm_gather=False):
    """Forward pass of TFEmbedding.

    x            : (B, F) integer indices, column i in [0, num_i]
    table_cat    : (V_total, E) -- per-field tables concatenated on the vocab axis
    field_offsets: (F,) int32   -- row offset of each field inside table_cat
    field_num    : (F,) int32   -- max valid index per field (== num_i)

    Returns (B, F, E), matching torch.cat([emb_i(x[:, i]).unsqueeze(1)], dim=1).
    Out-of-range indices are clamped (nn.Embedding would raise).
    """
    batch, num_fields = x.shape
    v_total, emb_dim = table_cat.shape

    # Clamp per field, then shift into the concatenated table.
    xi = jnp.clip(x.astype(jnp.int32), 0, field_num[None, :].astype(jnp.int32))
    idx_global = xi + field_offsets[None, :].astype(jnp.int32)        # (B, F)

    table_bytes = v_total * emb_dim * jnp.dtype(table_cat.dtype).itemsize
    use_fast = (not force_hbm_gather
                and v_total <= _ONEHOT_MAX_ROWS
                and table_bytes <= _FAST_PATH_MAX_TABLE_BYTES)

    if use_fast:
        bt = _pick_batch_tile(batch, num_fields, max_tile=32)
        out_flat = pl.pallas_call(
            _tf_embedding_onehot_kernel,
            out_shape=jax.ShapeDtypeStruct((batch, num_fields * emb_dim),
                                           table_cat.dtype),
            grid_spec=pltpu.PrefetchScalarGridSpec(
                num_scalar_prefetch=0,
                grid=(batch // bt,),
                in_specs=[
                    pl.BlockSpec((bt, num_fields), lambda b: (b, 0)),
                    # Full table block, same index every step -> stays resident.
                    pl.BlockSpec((v_total, emb_dim), lambda b: (0, 0)),
                ],
                out_specs=pl.BlockSpec((bt, num_fields * emb_dim),
                                       lambda b: (b, 0)),
            ),
            compiler_params=pltpu.CompilerParams(
                dimension_semantics=("parallel",)),
        )(idx_global, table_cat)
    else:
        # Large vocabularies: table stays in HBM, gather by per-row DMA.
        idx_field_major = idx_global.T                                 # (F, B)
        bt = _pick_batch_tile(batch, num_fields, max_desc=_MAX_DMA_DESCRIPTORS)
        out_flat = pl.pallas_call(
            _tf_embedding_hbm_gather_kernel,
            out_shape=jax.ShapeDtypeStruct((batch, num_fields * emb_dim),
                                           table_cat.dtype),
            grid_spec=pltpu.PrefetchScalarGridSpec(
                num_scalar_prefetch=1,                 # idx -> SMEM
                grid=(batch // bt,),
                in_specs=[pl.BlockSpec(memory_space=pl.ANY)],   # table in HBM
                out_specs=pl.BlockSpec((bt, num_fields * emb_dim),
                                       lambda b, idx: (b, 0)),
                scratch_shapes=[
                    pltpu.VMEM((num_fields, bt, emb_dim), table_cat.dtype),
                    pltpu.SemaphoreType.DMA((1,)),     # one shared DMA semaphore
                ],
            ),
            compiler_params=pltpu.CompilerParams(
                dimension_semantics=("parallel",)),
        )(idx_field_major, table_cat)

    return out_flat.reshape(batch, num_fields, emb_dim)


def init_tf_embedding_tables(key, token_field_value_num_list, emb_dim, padding_idx=0):
    """Matches TFEmbedding.init_weights: normal_(weight); weight[padding_idx] = 0.

    Returns:
      table_cat    : (sum_f (num_f + 1), emb_dim) f32 -- per-field tables concatenated
      field_offsets: (F,) int32 -- row offset of each field inside table_cat
      field_num    : (F,) int32 -- max valid index (== num_f) per field, for clamping
    """
    tables, offsets = [], []
    off = 0
    for i, num in enumerate(token_field_value_num_list):
        k = jax.random.fold_in(key, i)
        w = jax.random.normal(k, (num + 1, emb_dim), dtype=jnp.float32)
        w = w.at[padding_idx].set(0.0)
        tables.append(w)
        offsets.append(off)
        off += num + 1
    table_cat = jnp.concatenate(tables, axis=0)
    field_offsets = jnp.asarray(offsets, dtype=jnp.int32)
    field_num = jnp.asarray(token_field_value_num_list, dtype=jnp.int32)
    return table_cat, field_offsets, field_num


if __name__ == "__main__":
    token_field_value_num_list = [11, 23, 7, 17]   # per-field vocab sizes (num)
    emb_dim = 32                                   # F * E = 128 -> lane-dense output
    batch = 16                                     # -> 2 "parallel" grid steps (v7x)
    num_fields = len(token_field_value_num_list)

    key = jax.random.PRNGKey(0)
    k_tab, k_idx = jax.random.split(key)

    table_cat, field_offsets, field_num = init_tf_embedding_tables(
        k_tab, token_field_value_num_list, emb_dim)

    # x: (B, F), column i drawn from [0, num_i] inclusive (0 is padding_idx)
    cols = []
    for i, num in enumerate(token_field_value_num_list):
        ki = jax.random.fold_in(k_idx, i)
        cols.append(jax.random.randint(ki, (batch,), 0, num + 1, dtype=jnp.int32))
    x = jnp.stack(cols, axis=1)                                         # (B, F)

    # pure-JAX reference: per-field gather, stacked on dim 1
    ref = jnp.stack(
        [table_cat[field_offsets[i] + x[:, i]] for i in range(num_fields)], axis=1)

    # Fast path (VMEM-resident table + one-hot MXU gather).
    out_fast = jax.block_until_ready(
        tf_embedding(x, table_cat, field_offsets, field_num))
    assert out_fast.shape == (batch, num_fields, emb_dim), out_fast.shape
    assert jnp.allclose(out_fast, ref, atol=1e-5, rtol=1e-5), "one-hot path mismatch"

    # Large-vocab fallback (HBM row DMAs), forced here to exercise it as well.
    out_hbm = jax.block_until_ready(
        tf_embedding(x, table_cat, field_offsets, field_num, force_hbm_gather=True))
    assert out_hbm.shape == (batch, num_fields, emb_dim), out_hbm.shape
    assert jnp.allclose(out_hbm, ref, atol=1e-6, rtol=1e-6), "HBM-gather path mismatch"

    print("KERNEL_OK")
</pallas_src>

<mosaic_0001>
module attributes {stable_mosaic.version = 11 : i64} {
  func.func @_tf_embedding_onehot_kernel(%arg0: i32, %arg1: memref<8x4xi32, #tpu.memory_space<vmem>>, %arg2: memref<62x32xf32, #tpu.memory_space<vmem>>, %arg3: memref<8x128xf32, #tpu.memory_space<vmem>>) attributes {dimension_semantics = [#tpu.dimension_semantics<parallel>], iteration_bounds = array<i64: 2>, scalar_prefetch = 0 : i64, scratch_operands = 0 : i64, tpu.core_type = #tpu.core_type<tc>, window_params = [{transform_indices = @transform_0, window_bounds = array<i64: 8, 4>}, {pipeline_mode = #tpu.pipeline_mode<synchronous>, transform_indices = @transform_1, window_bounds = array<i64: 62, 32>}, {transform_indices = @transform_2, window_bounds = array<i64: 8, 128>}]} {
    %c0 = arith.constant 0 : index
    %c0_0 = arith.constant 0 : index
    %0 = vector.load %arg1[%c0, %c0_0] : memref<8x4xi32, #tpu.memory_space<vmem>>, vector<8x4xi32>
    %c0_1 = arith.constant 0 : index
    %c0_2 = arith.constant 0 : index
    %1 = vector.load %arg2[%c0_1, %c0_2] : memref<62x32xf32, #tpu.memory_space<vmem>>, vector<62x32xf32>
    %2 = tpu.iota {dimensions = array<i32: 1>} : vector<8x62xi32>
    %3 = vector.extract_strided_slice %0 {offsets = [0, 0], sizes = [8, 1], strides = [1, 1]} : vector<8x4xi32> to vector<8x1xi32>
    %4 = vector.shape_cast %3 : vector<8x1xi32> to vector<8xi32>
    %5 = vector.shape_cast %4 : vector<8xi32> to vector<8x1xi32>
    %6 = vector.broadcast %5 : vector<8x1xi32> to vector<8x62xi32>
    %7 = arith.cmpi eq, %2, %6 : vector<8x62xi32>
    %8 = arith.extui %7 : vector<8x62xi1> to vector<8x62xi32>
    %9 = arith.sitofp %8 : vector<8x62xi32> to vector<8x62xf32>
    %cst = arith.constant dense<0.000000e+00> : vector<8x32xf32>
    %10 = tpu.matmul %9, %1, %cst {dimension_numbers = #tpu.dot_dimension_numbers<[1], [0], [0], [1], [0, 0, 1, 1], [], []>, precision = #tpu.contract_precision<fp32>} : vector<8x62xf32>, vector<62x32xf32>, vector<8x32xf32> -> vector<8x32xf32>
    %11 = vector.extract_strided_slice %0 {offsets = [0, 1], sizes = [8, 1], strides = [1, 1]} : vector<8x4xi32> to vector<8x1xi32>
    %12 = vector.shape_cast %11 : vector<8x1xi32> to vector<8xi32>
    %13 = vector.shape_cast %12 : vector<8xi32> to vector<8x1xi32>
    %14 = vector.broadcast %13 : vector<8x1xi32> to vector<8x62xi32>
    %15 = arith.cmpi eq, %2, %14 : vector<8x62xi32>
    %16 = arith.extui %15 : vector<8x62xi1> to vector<8x62xi32>
    %17 = arith.sitofp %16 : vector<8x62xi32> to vector<8x62xf32>
    %cst_3 = arith.constant dense<0.000000e+00> : vector<8x32xf32>
    %18 = tpu.matmul %17, %1, %cst_3 {dimension_numbers = #tpu.dot_dimension_numbers<[1], [0], [0], [1], [0, 0, 1, 1], [], []>, precision = #tpu.contract_precision<fp32>} : vector<8x62xf32>, vector<62x32xf32>, vector<8x32xf32> -> vector<8x32xf32>
    %19 = vector.extract_strided_slice %0 {offsets = [0, 2], sizes = [8, 1], strides = [1, 1]} : vector<8x4xi32> to vector<8x1xi32>
    %20 = vector.shape_cast %19 : vector<8x1xi32> to vector<8xi32>
    %21 = vector.shape_cast %20 : vector<8xi32> to vector<8x1xi32>
    %22 = vector.broadcast %21 : vector<8x1xi32> to vector<8x62xi32>
    %23 = arith.cmpi eq, %2, %22 : vector<8x62xi32>
    %24 = arith.extui %23 : vector<8x62xi1> to vector<8x62xi32>
    %25 = arith.sitofp %24 : vector<8x62xi32> to vector<8x62xf32>
    %cst_4 = arith.constant dense<0.000000e+00> : vector<8x32xf32>
    %26 = tpu.matmul %25, %1, %cst_4 {dimension_numbers = #tpu.dot_dimension_numbers<[1], [0], [0], [1], [0, 0, 1, 1], [], []>, precision = #tpu.contract_precision<fp32>} : vector<8x62xf32>, vector<62x32xf32>, vector<8x32xf32> -> vector<8x32xf32>
    %27 = vector.extract_strided_slice %0 {offsets = [0, 3], sizes = [8, 1], strides = [1, 1]} : vector<8x4xi32> to vector<8x1xi32>
    %28 = vector.shape_cast %27 : vector<8x1xi32> to vector<8xi32>
    %29 = vector.shape_cast %28 : vector<8xi32> to vector<8x1xi32>
    %30 = vector.broadcast %29 : vector<8x1xi32> to vector<8x62xi32>
    %31 = arith.cmpi eq, %2, %30 : vector<8x62xi32>
    %32 = arith.extui %31 : vector<8x62xi1> to vector<8x62xi32>
    %33 = arith.sitofp %32 : vector<8x62xi32> to vector<8x62xf32>
    %cst_5 = arith.constant dense<0.000000e+00> : vector<8x32xf32>
    %34 = tpu.matmul %33, %1, %cst_5 {dimension_numbers = #tpu.dot_dimension_numbers<[1], [0], [0], [1], [0, 0, 1, 1], [], []>, precision = #tpu.contract_precision<fp32>} : vector<8x62xf32>, vector<62x32xf32>, vector<8x32xf32> -> vector<8x32xf32>
    %35 = tpu.concatenate %10, %18, %26, %34 in 1 : vector<8x32xf32>, vector<8x32xf32>, vector<8x32xf32>, vector<8x32xf32> -> vector<8x128xf32>
    %c0_6 = arith.constant 0 : index
    %c0_7 = arith.constant 0 : index
    %36 = vector.load %arg3[%c0_6, %c0_7] : memref<8x128xf32, #tpu.memory_space<vmem>>, vector<8x128xf32>
    tpu.vector_store %arg3[%c0_6, %c0_7], %35 {strides = array<i32>} : memref<8x128xf32, #tpu.memory_space<vmem>>, vector<8x128xf32>,
    return
  }
  func.func @transform_0(%arg0: i32) -> (i32, i32) {
    %c0_i32 = arith.constant 0 : i32
    %c0_i32_0 = arith.constant 0 : i32
    return %arg0, %c0_i32 : i32, i32
  }
  func.func @transform_1(%arg0: i32) -> (i32, i32) {
    %c0_i32 = arith.constant 0 : i32
    %c0_i32_0 = arith.constant 0 : i32
    %c0_i32_1 = arith.constant 0 : i32
    return %c0_i32, %c0_i32_0 : i32, i32
  }
  func.func @transform_2(%arg0: i32) -> (i32, i32) {
    %c0_i32 = arith.constant 0 : i32
    %c0_i32_0 = arith.constant 0 : i32
    return %arg0, %c0_i32 : i32, i32
  }
}

</mosaic_0001>

<llo_original>
// kernel: tpu_custom_call.1
$region0: #{tpu_custom_call.1}
  #allocation0 [shape = 'u32[]', space=smem, size = 0x4, offset = 0x4, fixed_abs, tag = 'smem constant byte address 0x4 - core index']
  #allocation1 [shape = 'u32[144,128]{1,0:T(1,128)}', space=vmem, size = 0x12000, scoped, tag = 'internal scratch']
  %s0 = inlined_call_operand.vmem [shape: s32[16,4], index: 0, kind: input, shape index: {}]
  %s1 = inlined_call_operand.vmem [shape: f32[62,32], index: 1, kind: input, shape index: {}]
  %s2 = inlined_call_operand.hbm [shape: f32[16,128], index: 2, kind: output, shape index: {}]
  %s3 = sld [smem:[#allocation0]]
  $region41: #{tpu_custom_call.1} parent=0
    _
  %s5 = ssub.s32 1, %s3
  %s6 = scalar_select 0, %s5, %s3
  $region1: #{tpu_custom_call.1} parent=0
    #allocation2 [shape = 'u8[8192]{0}', space=vmem, size = 0x2000, scoped, tag = 'output window, operand 0']
    #allocation3 [shape = 's32[2]{0}', space=sflag, size = 0x8, scoped, tag = 'scoped memory for tpu_custom_call.1']
    %7 = vsyncpa [#allocation3], 0
    %s8 = scalar_lea.sflag [#allocation3], 1
    %9 = vsyncpa %s8, 0
    loop: start=0, step=1, limit=4
    $region2: #{tpu_custom_call.1} parent=1 // loop_pre_header
      _
    $region3: #{tpu_custom_call.1} parent=1 // loop_header
      %s11 = sphi 0, %s15
      %p12 = scmp.ge.s32.totalorder %s11, 4
      %s21 = sphi 0, %s23
      %s24 = sphi 0, %s21
      %s25 = sphi 0, %s24
      %s41 = sphi 0, %s25
      %s45 = sphi 0, %s45
      %s47 = sphi 0, %s45
      %s48 = sphi 0, %s47
      %s62 = sphi 0, %s48
      %s68 = sphi 0, %s70
      %s71 = sphi 0, %s68
      %s72 = sphi 0, %s71
      %s88 = sphi 0, %s72
    $region4: #{tpu_custom_call.1} parent=1 // loop_header_branch
      %14 = sbr.rel (%p12) target = $region8
    $region5: #{tpu_custom_call.1} parent=1 // loop_body
      %s16 = ssub.s32 %s11, 1
      %s17 = ssub.s32 %s11, 2
      %s18 = sadd.s32 %s11, 1
      %s19 = ssub.s32 %s11, %s18
      %p20 = scmp.eq.s32.totalorder %s19, 0
      %s22 = sadd.s32 %s21, 1
      %s23 = scalar_select %p20, %s21, %s22
      %p26 = pneg %p20
      %p27 = scmp.eq.s32.totalorder %s11, 1
      %p28 = por %p26, %p27
      %p29 = scmp.ne.s32.totalorder %s21, %s24
      %p30 = scmp.eq.s32.totalorder %s11, 0
      %p31 = por %p29, %p30
      %p32 = scmp.ne.s32.totalorder %s21, %s24
      %p33 = scmp.eq.s32.totalorder %s16, 1
      %p34 = por %p32, %p33
      %p35 = scmp.ne.s32.totalorder %s24, %s25
      %p36 = scmp.eq.s32.totalorder %s16, 0
      %p37 = por %p35, %p36
      %p38 = scmp.ne.s32.totalorder %s24, %s25
      %p39 = scmp.eq.s32.totalorder %s17, 1
      %p40 = por %p38, %p39
      %p42 = scmp.ne.s32.totalorder %s25, %s41
      %p43 = scmp.eq.s32.totalorder %s17, 0
      %p44 = por %p42, %p43
      %s46 = sadd.s32 %s45, 1
      %p49 = scmp.eq.s32.totalorder %s11, 1
      %p50 = scmp.ne.s32.totalorder %s45, %s47
      %p51 = scmp.eq.s32.totalorder %s11, 0
      %p52 = por %p50, %p51
      %p53 = scmp.ne.s32.totalorder %s45, %s47
      %p54 = scmp.eq.s32.totalorder %s16, 1
      %p55 = por %p53, %p54
      %p56 = scmp.ne.s32.totalorder %s47, %s48
      %p57 = scmp.eq.s32.totalorder %s16, 0
      %p58 = por %p56, %p57
      %p59 = scmp.ne.s32.totalorder %s47, %s48
      %p60 = scmp.eq.s32.totalorder %s17, 1
      %p61 = por %p59, %p60
      %p63 = scmp.ne.s32.totalorder %s48, %s62
      %p64 = scmp.eq.s32.totalorder %s17, 0
      %p65 = por %p63, %p64
      %s66 = ssub.s32 %s11, %s18
      %p67 = scmp.eq.s32.totalorder %s66, 0
      %s69 = sadd.s32 %s68, 1
      %s70 = scalar_select %p67, %s68, %s69
      %p73 = pneg %p67
      %p74 = scmp.eq.s32.totalorder %s11, 1
      %p75 = por %p73, %p74
      %p76 = scmp.ne.s32.totalorder %s68, %s71
      %p77 = scmp.eq.s32.totalorder %s11, 0
      %p78 = por %p76, %p77
      %p79 = scmp.ne.s32.totalorder %s68, %s71
      %p80 = scmp.eq.s32.totalorder %s16, 1
      %p81 = por %p79, %p80
      %p82 = scmp.ne.s32.totalorder %s71, %s72
      %p83 = scmp.eq.s32.totalorder %s16, 0
      %p84 = por %p82, %p83
      %p85 = scmp.ne.s32.totalorder %s71, %s72
      %p86 = scmp.eq.s32.totalorder %s17, 1
      %p87 = por %p85, %p86
      %p89 = scmp.ne.s32.totalorder %s72, %s88
      %p90 = scmp.eq.s32.totalorder %s17, 0
      %p91 = por %p89, %p90
      %p92 = scmp.le.s32.totalorder 1, %s11
      %p93 = scmp.lt.s32.totalorder %s11, 3
      %p94 = pnand %p92, %p93
      %p95 = pneg %p94
      // Predicated region
      $region9: #{tpu_custom_call.1} parent=5 // pred_check
        _
      $region10: #{tpu_custom_call.1} parent=5 // pred_check_branch
        %97 = sbr.rel (%p94) target = $region12
      $region11: #{tpu_custom_call.1} parent=5 // pred_region
        %s98 = ssub.s32 %s11, 1
        // Predicated region
        $region13: #{tpu_custom_call.1} parent=11 // pred_check
          %p99 = pneg %p58
        $region14: #{tpu_custom_call.1} parent=11 // pred_check_branch
          %101 = sbr.rel (%p99) target = $region16
        $region15: #{tpu_custom_call.1} parent=11 // pred_region
          _
        $region16: #{tpu_custom_call.1} parent=11 // pred_fallthru
          _
      $region12: #{tpu_custom_call.1} parent=5 // pred_fallthru
        _
      %p102 = scmp.lt.s32.totalorder %s11, 2
      // Predicated region
      $region17: #{tpu_custom_call.1} parent=5 // pred_check
        %p103 = pneg %p102
      $region18: #{tpu_custom_call.1} parent=5 // pred_check_branch
        %105 = sbr.rel (%p103) target = $region20
      $region19: #{tpu_custom_call.1} parent=5 // pred_region
        // Predicated region
        $region21: #{tpu_custom_call.1} parent=19 // pred_check
          %p106 = pneg %p31
        $region22: #{tpu_custom_call.1} parent=19 // pred_check_branch
          %108 = sbr.rel (%p106) target = $region24
        $region23: #{tpu_custom_call.1} parent=19 // pred_region
          %p109 = scmp.lt.s32.totalorder %s11, 1
          %s110 = scalar_select %p109, %s11, 1
          %s111 = smul.addr %s110, 8
          %s112 = scalar_lea.vmem %s0, %s111
        $region24: #{tpu_custom_call.1} parent=19 // pred_fallthru
          _
      $region20: #{tpu_custom_call.1} parent=5 // pred_fallthru
        _
      %p113 = scmp.le.s32.totalorder 1, %s11
      %p114 = scmp.lt.s32.totalorder %s11, 3
      %p115 = pnand %p113, %p114
      %p116 = pneg %p115
      // Predicated region
      $region25: #{tpu_custom_call.1} parent=5 // pred_check
        _
      $region26: #{tpu_custom_call.1} parent=5 // pred_check_branch
        %118 = sbr.rel (%p115) target = $region28
      $region27: #{tpu_custom_call.1} parent=5 // pred_region
        %s119 = ssub.s32 %s11, 1
        %p120 = scmp.lt.s32.totalorder %s16, 1
        %s121 = scalar_select %p120, %s16, 1
        %s122 = smul.addr %s121, 8
        %s123 = scalar_lea.vmem %s0, %s122
        %p124 = pneg %p37
        %p125 = pneg %p34
        %p126 = pneg %p58
        %p127 = pneg %p55
        %p128 = pneg %p84
        %p129 = pneg %p81
        %s130 = sand.u32 %s71, 1
        %s131 = scalar_lea.sflag [#allocation3], %s130
        %s132 = sand.u32 %s71, 1
        %s133 = smul.addr %s132, 8
        %s134 = scalar_lea.vmem [#allocation2], %s133
        %p135 = scmp.lt.s32.totalorder %s16, 1
        %s136 = scalar_select %p135, %s16, 1
        %s137 = smul.addr %s136, 8
        %s138 = scalar_lea.vmem %s0, %s137
        %v139 = vld [vmem:[%s138] sm:$0xff]
        %v140 = vld [vmem:[%s1] sm:$0xff]
        %v141 = vld [vmem:[%s1 + $0x8] sm:$0xff]
        %v142 = vld [vmem:[%s1 + $0x10] sm:$0xff]
        %v143 = vld [vmem:[%s1 + $0x18] sm:$0xff]
        %v144 = vld [vmem:[%s1 + $0x20] sm:$0xff]
        %v145 = vld [vmem:[%s1 + $0x28] sm:$0xff]
        %v146 = vld [vmem:[%s1 + $0x30] sm:$0xff]
        %v147 = vld [vmem:[%s1 + $0x38] sm:$0x3f]
        %v148 = vlaneseq
        %v149 = vand.u32 %v148, 127
        %150 = vset.pattern.permute.xlu0 0
        %151 = vperm.xlu0 %150, %v139
        %v152 = vpop.permute.xlu0 %151
        %vm153 = vcmp.eq.s32.totalorder %v149, %v152
        %v154 = vsel %vm153, 1, 0
        %v155 = vcvt.s32.f32 %v154
        %vm156 = vcmask 506880
        %v158 = vsel %vm156, %v155, 0
        %vm160 = vcmask 1045504
        %v162 = vsel %vm160, %v147, 0
        %164 = vmatprep.subr.mxu0 0.0
        %v165 = vand.u32 %v140, 4294901760
        %166 = vmatpush1.msra.mxu0 %v165
        %167 = vmatprep.subr.mxu0 0.0
        %v168 = vand.u32 %v141, 4294901760
        %169 = vmatpush1.msra.mxu0 %v168
        %170 = vmatprep.subr.mxu0 0.0
        %v171 = vand.u32 %v142, 4294901760
        %172 = vmatpush1.msra.mxu0 %v171
        %173 = vmatprep.subr.mxu0 0.0
        %v174 = vand.u32 %v143, 4294901760
        %175 = vmatpush1.msra.mxu0 %v174
        %176 = vmatprep.subr.mxu0 0.0
        %v177 = vand.u32 %v144, 4294901760
        %178 = vmatpush1.msra.mxu0 %v177
        %179 = vmatprep.subr.mxu0 0.0
        %v180 = vand.u32 %v145, 4294901760
        %181 = vmatpush1.msra.mxu0 %v180
        %182 = vmatprep.subr.mxu0 0.0
        %v183 = vand.u32 %v146, 4294901760
        %184 = vmatpush1.msra.mxu0 %v183
        %185 = vmatprep.subr.mxu0 0.0
        %v186 = vand.u32 %v162, 4294901760
        %187 = vmatpush1.msra.mxu0 %v186
        %188 = vmatprep.subr.mxu0 0.0
        %189 = vmatpush1.msra.mxu0 0.0
        %190 = vmatprep.subr.mxu0 0.0
        %191 = vmatpush1.msra.mxu0 0.0
        %192 = vmatprep.subr.mxu0 0.0
        %193 = vmatpush1.msra.mxu0 0.0
        %194 = vmatprep.subr.mxu0 0.0
        %195 = vmatpush1.msra.mxu0 0.0
        %196 = vmatprep.subr.mxu0 0.0
        %197 = vmatpush1.msra.mxu0 0.0
        %198 = vmatprep.subr.mxu0 0.0
        %199 = vmatpush1.msra.mxu0 0.0
        %200 = vmatprep.subr.mxu0 0.0
        %201 = vmatpush1.msra.mxu0 0.0
        %202 = vmatprep.subr.mxu0 0.0
        %203 = vmatpush1.msra.mxu0 0.0
        %204 = vmatprep.subr.mxu0 0.0
        %205 = vmatpush1.msra.mxu0 0.0
        %206 = vmatprep.subr.mxu0 0.0
        %207 = vmatpush1.msra.mxu0 0.0
        %208 = vmatprep.subr.mxu0 0.0
        %209 = vmatpush1.msra.mxu0 0.0
        %210 = vmatprep.subr.mxu0 0.0
        %211 = vmatpush1.msra.mxu0 0.0
        %212 = vmatprep.subr.mxu0 0.0
        %213 = vmatpush1.msra.mxu0 0.0
        %214 = vmatprep.subr.mxu0 0.0
        %215 = vmatpush1.msra.mxu0 0.0
        %216 = vmatprep.subr.mxu0 0.0
        %217 = vmatpush1.msra.mxu0 0.0
        %218 = vmatprep.subr.mxu0 0.0
        %219 = vmatpush1.msra.mxu0 0.0
        %220 = vmatprep.subr.mxu0 0.0
        %221 = vmatpush1.msra.mxu0 0.0
        %222 = vmatprep.subr.mxu0 0.0
        %223 = vmatpush1.msra.mxu0 0.0
        %224 = vmatprep.subr.mxu0 0.0
        %225 = vmatpush1.msra.mxu0 0.0
        %226 = vmatprep.subr.mxu0 0.0
        %227 = vmatpush1.msra.mxu0 0.0
        %228 = vmatprep.subr.mxu0 0.0
        %229 = vmatpush1.msra.mxu0 0.0
        %230 = vmatprep.subr.mxu0 0.0
        %231 = vmatpush1.msra.mxu0 0.0
        %232 = vmatprep.subr.mxu0 0.0
        %233 = vmatpush1.msra.mxu0 0.0
        %234 = vmatprep.subr.mxu0 0.0
        %235 = vmatpush1.msra.mxu0 0.0
        %236 = vmatprep.mubr.f32.mxu0 0.0
        %v237 = vand.u32 %v158, 4294901760
        %v238 = vsub.f32 %v158, %v237
        %v239 = vand.u32 %v238, 4294901760
        %v240 = vsub.f32 %v238, %v239
        %v241 = vand.u32 %v240, 4294901760
        %242 = vmatmul.mubr.f32.gmra.mrb[0].mxu0 %v241
        %v243 = vpop.f32.mrb[0].mxu0
        %v244 = vadd.f32 0.0, %v243
        %v245 = vpop.f32.mrb[0].mxu0
        %246 = vdwg.mxu0
        %247 = vmatprep.subr.mxu0 0.0
        %v248 = vand.u32 %v140, 4294901760
        %v249 = vsub.f32 %v140, %v248
        %v250 = vand.u32 %v249, 4294901760
        %v251 = vsub.f32 %v249, %v250
        %v252 = vand.u32 %v251, 4294901760
        %253 = vmatpush1.msra.mxu0 %v252
        %254 = vmatprep.subr.mxu0 0.0
        %v255 = vand.u32 %v141, 4294901760
        %v256 = vsub.f32 %v141, %v255
        %v257 = vand.u32 %v256, 4294901760
        %v258 = vsub.f32 %v256, %v257
        %v259 = vand.u32 %v258, 4294901760
        %260 = vmatpush1.msra.mxu0 %v259
        %261 = vmatprep.subr.mxu0 0.0
        %v262 = vand.u32 %v142, 4294901760
        %v263 = vsub.f32 %v142, %v262
        %v264 = vand.u32 %v263, 4294901760
        %v265 = vsub.f32 %v263, %v264
        %v266 = vand.u32 %v265, 4294901760
        %267 = vmatpush1.msra.mxu0 %v266
        %268 = vmatprep.subr.mxu0 0.0
        %v269 = vand.u32 %v143, 4294901760
        %v270 = vsub.f32 %v143, %v269
        %v271 = vand.u32 %v270, 4294901760
        %v272 = vsub.f32 %v270, %v271
        %v273 = vand.u32 %v272, 4294901760
        %274 = vmatpush1.msra.mxu0 %v273
        %275 = vmatprep.subr.mxu0 0.0
        %v276 = vand.u32 %v144, 4294901760
        %v277 = vsub.f32 %v144, %v276
        %v278 = vand.u32 %v277, 4294901760
        %v279 = vsub.f32 %v277, %v278
        %v280 = vand.u32 %v279, 4294901760
        %281 = vmatpush1.msra.mxu0 %v280
        %282 = vmatprep.subr.mxu0 0.0
        %v283 = vand.u32 %v145, 4294901760
        %v284 = vsub.f32 %v145, %v283
        %v285 = vand.u32 %v284, 4294901760
        %v286 = vsub.f32 %v284, %v285
        %v287 = vand.u32 %v286, 4294901760
        %288 = vmatpush1.msra.mxu0 %v287
        %289 = vmatprep.subr.mxu0 0.0
        %v290 = vand.u32 %v146, 4294901760
        %v291 = vsub.f32 %v146, %v290
        %v292 = vand.u32 %v291, 4294901760
        %v293 = vsub.f32 %v291, %v292
        %v294 = vand.u32 %v293, 4294901760
        %295 = vmatpush1.msra.mxu0 %v294
        %296 = vmatprep.subr.mxu0 0.0
        %v297 = vand.u32 %v162, 4294901760
        %v298 = vsub.f32 %v162, %v297
        %v299 = vand.u32 %v298, 4294901760
        %v300 = vsub.f32 %v298, %v299
        %v301 = vand.u32 %v300, 4294901760
        %302 = vmatpush1.msra.mxu0 %v301
        %303 = vmatprep.subr.mxu0 0.0
        %304 = vmatpush1.msra.mxu0 0.0
        %305 = vmatprep.subr.mxu0 0.0
        %306 = vmatpush1.msra.mxu0 0.0
        %307 = vmatprep.subr.mxu0 0.0
        %308 = vmatpush1.msra.mxu0 0.0
        %309 = vmatprep.subr.mxu0 0.0
        %310 = vmatpush1.msra.mxu0 0.0
        %311 = vmatprep.subr.mxu0 0.0
        %312 = vmatpush1.msra.mxu0 0.0
        %313 = vmatprep.subr.mxu0 0.0
        %314 = vmatpush1.msra.mxu0 0.0
        %315 = vmatprep.subr.mxu0 0.0
        %316 = vmatpush1.msra.mxu0 0.0
        %317 = vmatprep.subr.mxu0 0.0
        %318 = vmatpush1.msra.mxu0 0.0
        %319 = vmatprep.subr.mxu0 0.0
        %320 = vmatpush1.msra.mxu0 0.0
        %321 = vmatprep.subr.mxu0 0.0
        %322 = vmatpush1.msra.mxu0 0.0
        %323 = vmatprep.subr.mxu0 0.0
        %324 = vmatpush1.msra.mxu0 0.0
        %325 = vmatprep.subr.mxu0 0.0
        %326 = vmatpush1.msra.mxu0 0.0
        %327 = vmatprep.subr.mxu0 0.0
        %328 = vmatpush1.msra.mxu0 0.0
        %329 = vmatprep.subr.mxu0 0.0
        %330 = vmatpush1.msra.mxu0 0.0
        %331 = vmatprep.subr.mxu0 0.0
        %332 = vmatpush1.msra.mxu0 0.0
        %333 = vmatprep.subr.mxu0 0.0
        %334 = vmatpush1.msra.mxu0 0.0
        %335 = vmatprep.subr.mxu0 0.0
        %336 = vmatpush1.msra.mxu0 0.0
        %337 = vmatprep.subr.mxu0 0.0
        %338 = vmatpush1.msra.mxu0 0.0
        %339 = vmatprep.subr.mxu0 0.0
        %340 = vmatpush1.msra.mxu0 0.0
        %341 = vmatprep.subr.mxu0 0.0
        %342 = vmatpush1.msra.mxu0 0.0
        %343 = vmatprep.subr.mxu0 0.0
        %344 = vmatpush1.msra.mxu0 0.0
        %345 = vmatprep.subr.mxu0 0.0
        %346 = vmatpush1.msra.mxu0 0.0
        %347 = vmatprep.subr.mxu0 0.0
        %348 = vmatpush1.msra.mxu0 0.0
        %349 = vmatprep.subr.mxu0 0.0
        %350 = vmatpush1.msra.mxu0 0.0
        %351 = vmatprep.mubr.f32.mxu0 0.0
        %v352 = vand.u32 %v158, 4294901760
        %353 = vmatmul.mubr.f32.gmra.mrb[0].mxu0 %v352
        %v354 = vpop.f32.mrb[0].mxu0
        %v355 = vadd.f32 %v244, %v354
        %v356 = vpop.f32.mrb[0].mxu0
        %357 = vdwg.mxu0
        %358 = vmatprep.subr.mxu0 0.0
        %v359 = vand.u32 %v140, 4294901760
        %v360 = vsub.f32 %v140, %v359
        %361 = vmatpush1.msra.mxu0 %v360
        %362 = vmatprep.subr.mxu0 0.0
        %v363 = vand.u32 %v141, 4294901760
        %v364 = vsub.f32 %v141, %v363
        %365 = vmatpush1.msra.mxu0 %v364
        %366 = vmatprep.subr.mxu0 0.0
        %v367 = vand.u32 %v142, 4294901760
        %v368 = vsub.f32 %v142, %v367
        %369 = vmatpush1.msra.mxu0 %v368
        %370 = vmatprep.subr.mxu0 0.0
        %v371 = vand.u32 %v143, 4294901760
        %v372 = vsub.f32 %v143, %v371
        %373 = vmatpush1.msra.mxu0 %v372
        %374 = vmatprep.subr.mxu0 0.0
        %v375 = vand.u32 %v144, 4294901760
        %v376 = vsub.f32 %v144, %v375
        %377 = vmatpush1.msra.mxu0 %v376
        %378 = vmatprep.subr.mxu0 0.0
        %v379 = vand.u32 %v145, 4294901760
        %v380 = vsub.f32 %v145, %v379
        %381 = vmatpush1.msra.mxu0 %v380
        %382 = vmatprep.subr.mxu0 0.0
        %v383 = vand.u32 %v146, 4294901760
        %v384 = vsub.f32 %v146, %v383
        %385 = vmatpush1.msra.mxu0 %v384
        %386 = vmatprep.subr.mxu0 0.0
        %v387 = vand.u32 %v162, 4294901760
        %v388 = vsub.f32 %v162, %v387
        %389 = vmatpush1.msra.mxu0 %v388
        %390 = vmatprep.subr.mxu0 0.0
        %391 = vmatpush1.msra.mxu0 0.0
        %392 = vmatprep.subr.mxu0 0.0
        %393 = vmatpush1.msra.mxu0 0.0
        %394 = vmatprep.subr.mxu0 0.0
        %395 = vmatpush1.msra.mxu0 0.0
        %396 = vmatprep.subr.mxu0 0.0
        %397 = vmatpush1.msra.mxu0 0.0
        %398 = vmatprep.subr.mxu0 0.0
        %399 = vmatpush1.msra.mxu0 0.0
        %400 = vmatprep.subr.mxu0 0.0
        %401 = vmatpush1.msra.mxu0 0.0
        %402 = vmatprep.subr.mxu0 0.0
        %403 = vmatpush1.msra.mxu0 0.0
        %404 = vmatprep.subr.mxu0 0.0
        %405 = vmatpush1.msra.mxu0 0.0
        %406 = vmatprep.subr.mxu0 0.0
        %407 = vmatpush1.msra.mxu0 0.0
        %408 = vmatprep.subr.mxu0 0.0
        %409 = vmatpush1.msra.mxu0 0.0
        %410 = vmatprep.subr.mxu0 0.0
        %411 = vmatpush1.msra.mxu0 0.0
        %412 = vmatprep.subr.mxu0 0.0
        %413 = vmatpush1.msra.mxu0 0.0
        %414 = vmatprep.subr.mxu0 0.0
        %415 = vmatpush1.msra.mxu0 0.0
        %416 = vmatprep.subr.mxu0 0.0
        %417 = vmatpush1.msra.mxu0 0.0
        %418 = vmatprep.subr.mxu0 0.0
        %419 = vmatpush1.msra.mxu0 0.0
        %420 = vmatprep.subr.mxu0 0.0
        %421 = vmatpush1.msra.mxu0 0.0
        %422 = vmatprep.subr.mxu0 0.0
        %423 = vmatpush1.msra.mxu0 0.0
        %424 = vmatprep.subr.mxu0 0.0
        %425 = vmatpush1.msra.mxu0 0.0
        %426 = vmatprep.subr.mxu0 0.0
        %427 = vmatpush1.msra.mxu0 0.0
        %428 = vmatprep.subr.mxu0 0.0
        %429 = vmatpush1.msra.mxu0 0.0
        %430 = vmatprep.subr.mxu0 0.0
        %431 = vmatpush1.msra.mxu0 0.0
        %432 = vmatprep.subr.mxu0 0.0
        %433 = vmatpush1.msra.mxu0 0.0
        %434 = vmatprep.subr.mxu0 0.0
        %435 = vmatpush1.msra.mxu0 0.0
        %436 = vmatprep.subr.mxu0 0.0
        %437 = vmatpush1.msra.mxu0 0.0
        %438 = vmatprep.mubr.f32.mxu0 0.0
        %v439 = vand.u32 %v158, 4294901760
        %v440 = vsub.f32 %v158, %v439
        %441 = vmatmul.mubr.f32.gmra.mrb[0].mxu0 %v440
        %v442 = vpop.f32.mrb[0].mxu0
        %v443 = vadd.f32 %v355, %v442
        %v444 = vpop.f32.mrb[0].mxu0
        %445 = vdwg.mxu0
        %446 = vmatprep.subr.mxu0 0.0
        %v447 = vand.u32 %v140, 4294901760
        %448 = vmatpush1.msra.mxu0 %v447
        %449 = vmatprep.subr.mxu0 0.0
        %v450 = vand.u32 %v141, 4294901760
        %451 = vmatpush1.msra.mxu0 %v450
        %452 = vmatprep.subr.mxu0 0.0
        %v453 = vand.u32 %v142, 4294901760
        %454 = vmatpush1.msra.mxu0 %v453
        %455 = vmatprep.subr.mxu0 0.0
        %v456 = vand.u32 %v143, 4294901760
        %457 = vmatpush1.msra.mxu0 %v456
        %458 = vmatprep.subr.mxu0 0.0
        %v459 = vand.u32 %v144, 4294901760
        %460 = vmatpush1.msra.mxu0 %v459
        %461 = vmatprep.subr.mxu0 0.0
        %v462 = vand.u32 %v145, 4294901760
        %463 = vmatpush1.msra.mxu0 %v462
        %464 = vmatprep.subr.mxu0 0.0
        %v465 = vand.u32 %v146, 4294901760
        %466 = vmatpush1.msra.mxu0 %v465
        %467 = vmatprep.subr.mxu0 0.0
        %v468 = vand.u32 %v162, 4294901760
        %469 = vmatpush1.msra.mxu0 %v468
        %470 = vmatprep.subr.mxu0 0.0
        %471 = vmatpush1.msra.mxu0 0.0
        %472 = vmatprep.subr.mxu0 0.0
        %473 = vmatpush1.msra.mxu0 0.0
        %474 = vmatprep.subr.mxu0 0.0
        %475 = vmatpush1.msra.mxu0 0.0
        %476 = vmatprep.subr.mxu0 0.0
        %477 = vmatpush1.msra.mxu0 0.0
        %478 = vmatprep.subr.mxu0 0.0
        %479 = vmatpush1.msra.mxu0 0.0
        %480 = vmatprep.subr.mxu0 0.0
        %481 = vmatpush1.msra.mxu0 0.0
        %482 = vmatprep.subr.mxu0 0.0
        %483 = vmatpush1.msra.mxu0 0.0
        %484 = vmatprep.subr.mxu0 0.0
        %485 = vmatpush1.msra.mxu0 0.0
        %486 = vmatprep.subr.mxu0 0.0
        %487 = vmatpush1.msra.mxu0 0.0
        %488 = vmatprep.subr.mxu0 0.0
        %489 = vmatpush1.msra.mxu0 0.0
        %490 = vmatprep.subr.mxu0 0.0
        %491 = vmatpush1.msra.mxu0 0.0
        %492 = vmatprep.subr.mxu0 0.0
        %493 = vmatpush1.msra.mxu0 0.0
        %494 = vmatprep.subr.mxu0 0.0
        %495 = vmatpush1.msra.mxu0 0.0
        %496 = vmatprep.subr.mxu0 0.0
        %497 = vmatpush1.msra.mxu0 0.0
        %498 = vmatprep.subr.mxu0 0.0
        %499 = vmatpush1.msra.mxu0 0.0
        %500 = vmatprep.subr.mxu0 0.0
        %501 = vmatpush1.msra.mxu0 0.0
        %502 = vmatprep.subr.mxu0 0.0
        %503 = vmatpush1.msra.mxu0 0.0
        %504 = vmatprep.subr.mxu0 0.0
        %505 = vmatpush1.msra.mxu0 0.0
        %506 = vmatprep.subr.mxu0 0.0
        %507 = vmatpush1.msra.mxu0 0.0
        %508 = vmatprep.subr.mxu0 0.0
        %509 = vmatpush1.msra.mxu0 0.0
        %510 = vmatprep.subr.mxu0 0.0
        %511 = vmatpush1.msra.mxu0 0.0
        %512 = vmatprep.subr.mxu0 0.0
        %513 = vmatpush1.msra.mxu0 0.0
        %514 = vmatprep.subr.mxu0 0.0
        %515 = vmatpush1.msra.mxu0 0.0
        %516 = vmatprep.subr.mxu0 0.0
        %517 = vmatpush1.msra.mxu0 0.0
        %518 = vmatprep.mubr.f32.mxu0 0.0
        %v519 = vand.u32 %v158, 4294901760
        %v520 = vsub.f32 %v158, %v519
        %v521 = vand.u32 %v520, 4294901760
        %522 = vmatmul.mubr.f32.gmra.mrb[0].mxu0 %v521
        %v523 = vpop.f32.mrb[0].mxu0
        %v524 = vadd.f32 %v443, %v523
        %v525 = vpop.f32.mrb[0].mxu0
        %526 = vdwg.mxu0
        %527 = vmatprep.subr.mxu0 0.0
        %v528 = vand.u32 %v140, 4294901760
        %v529 = vsub.f32 %v140, %v528
        %v530 = vand.u32 %v529, 4294901760
        %531 = vmatpush1.msra.mxu0 %v530
        %532 = vmatprep.subr.mxu0 0.0
        %v533 = vand.u32 %v141, 4294901760
        %v534 = vsub.f32 %v141, %v533
        %v535 = vand.u32 %v534, 4294901760
        %536 = vmatpush1.msra.mxu0 %v535
        %537 = vmatprep.subr.mxu0 0.0
        %v538 = vand.u32 %v142, 4294901760
        %v539 = vsub.f32 %v142, %v538
        %v540 = vand.u32 %v539, 4294901760
        %541 = vmatpush1.msra.mxu0 %v540
        %542 = vmatprep.subr.mxu0 0.0
        %v543 = vand.u32 %v143, 4294901760
        %v544 = vsub.f32 %v143, %v543
        %v545 = vand.u32 %v544, 4294901760
        %546 = vmatpush1.msra.mxu0 %v545
        %547 = vmatprep.subr.mxu0 0.0
        %v548 = vand.u32 %v144, 4294901760
        %v549 = vsub.f32 %v144, %v548
        %v550 = vand.u32 %v549, 4294901760
        %551 = vmatpush1.msra.mxu0 %v550
        %552 = vmatprep.subr.mxu0 0.0
        %v553 = vand.u32 %v145, 4294901760
        %v554 = vsub.f32 %v145, %v553
        %v555 = vand.u32 %v554, 4294901760
        %556 = vmatpush1.msra.mxu0 %v555
        %557 = vmatprep.subr.mxu0 0.0
        %v558 = vand.u32 %v146, 4294901760
        %v559 = vsub.f32 %v146, %v558
        %v560 = vand.u32 %v559, 4294901760
        %561 = vmatpush1.msra.mxu0 %v560
        %562 = vmatprep.subr.mxu0 0.0
        %v563 = vand.u32 %v162, 4294901760
        %v564 = vsub.f32 %v162, %v563
        %v565 = vand.u32 %v564, 4294901760
        %566 = vmatpush1.msra.mxu0 %v565
        %567 = vmatprep.subr.mxu0 0.0
        %568 = vmatpush1.msra.mxu0 0.0
        %569 = vmatprep.subr.mxu0 0.0
        %570 = vmatpush1.msra.mxu0 0.0
        %571 = vmatprep.subr.mxu0 0.0
        %572 = vmatpush1.msra.mxu0 0.0
        %573 = vmatprep.subr.mxu0 0.0
        %574 = vmatpush1.msra.mxu0 0.0
        %575 = vmatprep.subr.mxu0 0.0
        %576 = vmatpush1.msra.mxu0 0.0
        %577 = vmatprep.subr.mxu0 0.0
        %578 = vmatpush1.msra.mxu0 0.0
        %579 = vmatprep.subr.mxu0 0.0
        %580 = vmatpush1.msra.mxu0 0.0
        %581 = vmatprep.subr.mxu0 0.0
        %582 = vmatpush1.msra.mxu0 0.0
        %583 = vmatprep.subr.mxu0 0.0
        %584 = vmatpush1.msra.mxu0 0.0
        %585 = vmatprep.subr.mxu0 0.0
        %586 = vmatpush1.msra.mxu0 0.0
        %587 = vmatprep.subr.mxu0 0.0
        %588 = vmatpush1.msra.mxu0 0.0
        %589 = vmatprep.subr.mxu0 0.0
        %590 = vmatpush1.msra.mxu0 0.0
        %591 = vmatprep.subr.mxu0 0.0
        %592 = vmatpush1.msra.mxu0 0.0
        %593 = vmatprep.subr.mxu0 0.0
        %594 = vmatpush1.msra.mxu0 0.0
        %595 = vmatprep.subr.mxu0 0.0
        %596 = vmatpush1.msra.mxu0 0.0
        %597 = vmatprep.subr.mxu0 0.0
        %598 = vmatpush1.msra.mxu0 0.0
        %599 = vmatprep.subr.mxu0 0.0
        %600 = vmatpush1.msra.mxu0 0.0
        %601 = vmatprep.subr.mxu0 0.0
        %602 = vmatpush1.msra.mxu0 0.0
        %603 = vmatprep.subr.mxu0 0.0
        %604 = vmatpush1.msra.mxu0 0.0
        %605 = vmatprep.subr.mxu0 0.0
        %606 = vmatpush1.msra.mxu0 0.0
        %607 = vmatprep.subr.mxu0 0.0
        %608 = vmatpush1.msra.mxu0 0.0
        %609 = vmatprep.subr.mxu0 0.0
        %610 = vmatpush1.msra.mxu0 0.0
        %611 = vmatprep.subr.mxu0 0.0
        %612 = vmatpush1.msra.mxu0 0.0
        %613 = vmatprep.subr.mxu0 0.0
        %614 = vmatpush1.msra.mxu0 0.0
        %615 = vmatprep.mubr.f32.mxu0 0.0
        %v616 = vand.u32 %v158, 4294901760
        %617 = vmatmul.mubr.f32.gmra.mrb[0].mxu0 %v616
        %v618 = vpop.f32.mrb[0].mxu0
        %v619 = vadd.f32 %v524, %v618
        %v620 = vpop.f32.mrb[0].mxu0
        %621 = vdwg.mxu0
        %622 = vmatprep.subr.mxu0 0.0
        %v623 = vand.u32 %v140, 4294901760
        %624 = vmatpush1.msra.mxu0 %v623
        %625 = vmatprep.subr.mxu0 0.0
        %v626 = vand.u32 %v141, 4294901760
        %627 = vmatpush1.msra.mxu0 %v626
        %628 = vmatprep.subr.mxu0 0.0
        %v629 = vand.u32 %v142, 4294901760
        %630 = vmatpush1.msra.mxu0 %v629
        %631 = vmatprep.subr.mxu0 0.0
        %v632 = vand.u32 %v143, 4294901760
        %633 = vmatpush1.msra.mxu0 %v632
        %634 = vmatprep.subr.mxu0 0.0
        %v635 = vand.u32 %v144, 4294901760
        %636 = vmatpush1.msra.mxu0 %v635
        %637 = vmatprep.subr.mxu0 0.0
        %v638 = vand.u32 %v145, 4294901760
        %639 = vmatpush1.msra.mxu0 %v638
        %640 = vmatprep.subr.mxu0 0.0
        %v641 = vand.u32 %v146, 4294901760
        %642 = vmatpush1.msra.mxu0 %v641
        %643 = vmatprep.subr.mxu0 0.0
        %v644 = vand.u32 %v162, 4294901760
        %645 = vmatpush1.msra.mxu0 %v644
        %646 = vmatprep.subr.mxu0 0.0
        %647 = vmatpush1.msra.mxu0 0.0
        %648 = vmatprep.subr.mxu0 0.0
        %649 = vmatpush1.msra.mxu0 0.0
        %650 = vmatprep.subr.mxu0 0.0
        %651 = vmatpush1.msra.mxu0 0.0
        %652 = vmatprep.subr.mxu0 0.0
        %653 = vmatpush1.msra.mxu0 0.0
        %654 = vmatprep.subr.mxu0 0.0
        %655 = vmatpush1.msra.mxu0 0.0
        %656 = vmatprep.subr.mxu0 0.0
        %657 = vmatpush1.msra.mxu0 0.0
        %658 = vmatprep.subr.mxu0 0.0
        %659 = vmatpush1.msra.mxu0 0.0
        %660 = vmatprep.subr.mxu0 0.0
        %661 = vmatpush1.msra.mxu0 0.0
        %662 = vmatprep.subr.mxu0 0.0
        %663 = vmatpush1.msra.mxu0 0.0
        %664 = vmatprep.subr.mxu0 0.0
        %665 = vmatpush1.msra.mxu0 0.0
        %666 = vmatprep.subr.mxu0 0.0
        %667 = vmatpush1.msra.mxu0 0.0
        %668 = vmatprep.subr.mxu0 0.0
        %669 = vmatpush1.msra.mxu0 0.0
        %670 = vmatprep.subr.mxu0 0.0
        %671 = vmatpush1.msra.mxu0 0.0
        %672 = vmatprep.subr.mxu0 0.0
        %673 = vmatpush1.msra.mxu0 0.0
        %674 = vmatprep.subr.mxu0 0.0
        %675 = vmatpush1.msra.mxu0 0.0
        %676 = vmatprep.subr.mxu0 0.0
        %677 = vmatpush1.msra.mxu0 0.0
        %678 = vmatprep.subr.mxu0 0.0
        %679 = vmatpush1.msra.mxu0 0.0
        %680 = vmatprep.subr.mxu0 0.0
        %681 = vmatpush1.msra.mxu0 0.0
        %682 = vmatprep.subr.mxu0 0.0
        %683 = vmatpush1.msra.mxu0 0.0
        %684 = vmatprep.subr.mxu0 0.0
        %685 = vmatpush1.msra.mxu0 0.0
        %686 = vmatprep.subr.mxu0 0.0
        %687 = vmatpush1.msra.mxu0 0.0
        %688 = vmatprep.subr.mxu0 0.0
        %689 = vmatpush1.msra.mxu0 0.0
        %690 = vmatprep.subr.mxu0 0.0
        %691 = vmatpush1.msra.mxu0 0.0
        %692 = vmatprep.subr.mxu0 0.0
        %693 = vmatpush1.msra.mxu0 0.0
        %694 = vmatprep.mubr.f32.mxu0 0.0
        %v695 = vand.u32 %v158, 4294901760
        %696 = vmatmul.mubr.f32.gmra.mrb[0].mxu0 %v695
        %v697 = vpop.f32.mrb[0].mxu0
        %v698 = vadd.f32 %v619, %v697
        %v699 = vpop.f32.mrb[0].mxu0
        %700 = vdwg.mxu0
        %701 = vset.pattern.permute.xlu0 1
        %702 = vperm.xlu0 %701, %v139
        %v703 = vpop.permute.xlu0 %702
        %vm704 = vcmp.eq.s32.totalorder %v149, %v703
        %v705 = vsel %vm704, 1, 0
        %v706 = vcvt.s32.f32 %v705
        %v708 = vsel %vm156, %v706, 0
        %710 = vmatprep.subr.mxu0 0.0
        %v711 = vand.u32 %v140, 4294901760
        %712 = vmatpush1.msra.mxu0 %v711
        %713 = vmatprep.subr.mxu0 0.0
        %v714 = vand.u32 %v141, 4294901760
        %715 = vmatpush1.msra.mxu0 %v714
        %716 = vmatprep.subr.mxu0 0.0
        %v717 = vand.u32 %v142, 4294901760
        %718 = vmatpush1.msra.mxu0 %v717
        %719 = vmatprep.subr.mxu0 0.0
        %v720 = vand.u32 %v143, 4294901760
        %721 = vmatpush1.msra.mxu0 %v720
        %722 = vmatprep.subr.mxu0 0.0
        %v723 = vand.u32 %v144, 4294901760
        %724 = vmatpush1.msra.mxu0 %v723
        %725 = vmatprep.subr.mxu0 0.0
        %v726 = vand.u32 %v145, 4294901760
        %727 = vmatpush1.msra.mxu0 %v726
        %728 = vmatprep.subr.mxu0 0.0
        %v729 = vand.u32 %v146, 4294901760
        %730 = vmatpush1.msra.mxu0 %v729
        %731 = vmatprep.subr.mxu0 0.0
        %v732 = vand.u32 %v162, 4294901760
        %733 = vmatpush1.msra.mxu0 %v732
        %734 = vmatprep.subr.mxu0 0.0
        %735 = vmatpush1.msra.mxu0 0.0
        %736 = vmatprep.subr.mxu0 0.0
        %737 = vmatpush1.msra.mxu0 0.0
        %738 = vmatprep.subr.mxu0 0.0
        %739 = vmatpush1.msra.mxu0 0.0
        %740 = vmatprep.subr.mxu0 0.0
        %741 = vmatpush1.msra.mxu0 0.0
        %742 = vmatprep.subr.mxu0 0.0
        %743 = vmatpush1.msra.mxu0 0.0
        %744 = vmatprep.subr.mxu0 0.0
        %745 = vmatpush1.msra.mxu0 0.0
        %746 = vmatprep.subr.mxu0 0.0
        %747 = vmatpush1.msra.mxu0 0.0
        %748 = vmatprep.subr.mxu0 0.0
        %749 = vmatpush1.msra.mxu0 0.0
        %750 = vmatprep.subr.mxu0 0.0
        %751 = vmatpush1.msra.mxu0 0.0
        %752 = vmatprep.subr.mxu0 0.0
        %753 = vmatpush1.msra.mxu0 0.0
        %754 = vmatprep.subr.mxu0 0.0
        %755 = vmatpush1.msra.mxu0 0.0
        %756 = vmatprep.subr.mxu0 0.0
        %757 = vmatpush1.msra.mxu0 0.0
        %758 = vmatprep.subr.mxu0 0.0
        %759 = vmatpush1.msra.mxu0 0.0
        %760 = vmatprep.subr.mxu0 0.0
        %761 = vmatpush1.msra.mxu0 0.0
        %762 = vmatprep.subr.mxu0 0.0
        %763 = vmatpush1.msra.mxu0 0.0
        %764 = vmatprep.subr.mxu0 0.0
        %765 = vmatpush1.msra.mxu0 0.0
        %766 = vmatprep.subr.mxu0 0.0
        %767 = vmatpush1.msra.mxu0 0.0
        %768 = vmatprep.subr.mxu0 0.0
        %769 = vmatpush1.msra.mxu0 0.0
        %770 = vmatprep.subr.mxu0 0.0
        %771 = vmatpush1.msra.mxu0 0.0
        %772 = vmatprep.subr.mxu0 0.0
        %773 = vmatpush1.msra.mxu0 0.0
        %774 = vmatprep.subr.mxu0 0.0
        %775 = vmatpush1.msra.mxu0 0.0
        %776 = vmatprep.subr.mxu0 0.0
        %777 = vmatpush1.msra.mxu0 0.0
        %778 = vmatprep.subr.mxu0 0.0
        %779 = vmatpush1.msra.mxu0 0.0
        %780 = vmatprep.subr.mxu0 0.0
        %781 = vmatpush1.msra.mxu0 0.0
        %782 = vmatprep.mubr.f32.mxu0 0.0
        %v783 = vand.u32 %v708, 4294901760
        %v784 = vsub.f32 %v708, %v783
        %v785 = vand.u32 %v784, 4294901760
        %v786 = vsub.f32 %v784, %v785
        %v787 = vand.u32 %v786, 4294901760
        %788 = vmatmul.mubr.f32.gmra.mrb[0].mxu0 %v787
        %v789 = vpop.f32.mrb[0].mxu0
        %v790 = vadd.f32 0.0, %v789
        %v791 = vpop.f32.mrb[0].mxu0
        %792 = vdwg.mxu0
        %793 = vmatprep.subr.mxu0 0.0
        %v794 = vand.u32 %v140, 4294901760
        %v795 = vsub.f32 %v140, %v794
        %v796 = vand.u32 %v795, 4294901760
        %v797 = vsub.f32 %v795, %v796
        %v798 = vand.u32 %v797, 4294901760
        %799 = vmatpush1.msra.mxu0 %v798
        %800 = vmatprep.subr.mxu0 0.0
        %v801 = vand.u32 %v141, 4294901760
        %v802 = vsub.f32 %v141, %v801
        %v803 = vand.u32 %v802, 4294901760
        %v804 = vsub.f32 %v802, %v803
        %v805 = vand.u32 %v804, 4294901760
        %806 = vmatpush1.msra.mxu0 %v805
        %807 = vmatprep.subr.mxu0 0.0
        %v808 = vand.u32 %v142, 4294901760
        %v809 = vsub.f32 %v142, %v808
        %v810 = vand.u32 %v809, 4294901760
        %v811 = vsub.f32 %v809, %v810
        %v812 = vand.u32 %v811, 4294901760
        %813 = vmatpush1.msra.mxu0 %v812
        %814 = vmatprep.subr.mxu0 0.0
        %v815 = vand.u32 %v143, 4294901760
        %v816 = vsub.f32 %v143, %v815
        %v817 = vand.u32 %v816, 4294901760
        %v818 = vsub.f32 %v816, %v817
        %v819 = vand.u32 %v818, 4294901760
        %820 = vmatpush1.msra.mxu0 %v819
        %821 = vmatprep.subr.mxu0 0.0
        %v822 = vand.u32 %v144, 4294901760
        %v823 = vsub.f32 %v144, %v822
        %v824 = vand.u32 %v823, 4294901760
        %v825 = vsub.f32 %v823, %v824
        %v826 = vand.u32 %v825, 4294901760
        %827 = vmatpush1.msra.mxu0 %v826
        %828 = vmatprep.subr.mxu0 0.0
        %v829 = vand.u32 %v145, 4294901760
        %v830 = vsub.f32 %v145, %v829
        %v831 = vand.u32 %v830, 4294901760
        %v832 = vsub.f32 %v830, %v831
        %v833 = vand.u32 %v832, 4294901760
        %834 = vmatpush1.msra.mxu0 %v833
        %835 = vmatprep.subr.mxu0 0.0
        %v836 = vand.u32 %v146, 4294901760
        %v837 = vsub.f32 %v146, %v836
        %v838 = vand.u32 %v837, 4294901760
        %v839 = vsub.f32 %v837, %v838
        %v840 = vand.u32 %v839, 4294901760
        %841 = vmatpush1.msra.mxu0 %v840
        %842 = vmatprep.subr.mxu0 0.0
        %v843 = vand.u32 %v162, 4294901760
        %v844 = vsub.f32 %v162, %v843
        %v845 = vand.u32 %v844, 4294901760
        %v846 = vsub.f32 %v844, %v845
        %v847 = vand.u32 %v846, 4294901760
        %848 = vmatpush1.msra.mxu0 %v847
        %849 = vmatprep.subr.mxu0 0.0
        %850 = vmatpush1.msra.mxu0 0.0
        %851 = vmatprep.subr.mxu0 0.0
        %852 = vmatpush1.msra.mxu0 0.0
        %853 = vmatprep.subr.mxu0 0.0
        %854 = vmatpush1.msra.mxu0 0.0
        %855 = vmatprep.subr.mxu0 0.0
        %856 = vmatpush1.msra.mxu0 0.0
        %857 = vmatprep.subr.mxu0 0.0
        %858 = vmatpush1.msra.mxu0 0.0
        %859 = vmatprep.subr.mxu0 0.0
        %860 = vmatpush1.msra.mxu0 0.0
        %861 = vmatprep.subr.mxu0 0.0
        %862 = vmatpush1.msra.mxu0 0.0
        %863 = vmatprep.subr.mxu0 0.0
        %864 = vmatpush1.msra.mxu0 0.0
        %865 = vmatprep.subr.mxu0 0.0
        %866 = vmatpush1.msra.mxu0 0.0
        %867 = vmatprep.subr.mxu0 0.0
        %868 = vmatpush1.msra.mxu0 0.0
        %869 = vmatprep.subr.mxu0 0.0
        %870 = vmatpush1.msra.mxu0 0.0
        %871 = vmatprep.subr.mxu0 0.0
        %872 = vmatpush1.msra.mxu0 0.0
        %873 = vmatprep.subr.mxu0 0.0
        %874 = vmatpush1.msra.mxu0 0.0
        %875 = vmatprep.subr.mxu0 0.0
        %876 = vmatpush1.msra.mxu0 0.0
        %877 = vmatprep.subr.mxu0 0.0
        %878 = vmatpush1.msra.mxu0 0.0
        %879 = vmatprep.subr.mxu0 0.0
        %880 = vmatpush1.msra.mxu0 0.0
        %881 = vmatprep.subr.mxu0 0.0
        %882 = vmatpush1.msra.mxu0 0.0
        %883 = vmatprep.subr.mxu0 0.0
        %884 = vmatpush1.msra.mxu0 0.0
        %885 = vmatprep.subr.mxu0 0.0
        %886 = vmatpush1.msra.mxu0 0.0
        %887 = vmatprep.subr.mxu0 0.0
        %888 = vmatpush1.msra.mxu0 0.0
        %889 = vmatprep.subr.mxu0 0.0
        %890 = vmatpush1.msra.mxu0 0.0
        %891 = vmatprep.subr.mxu0 0.0
        %892 = vmatpush1.msra.mxu0 0.0
        %893 = vmatprep.subr.mxu0 0.0
        %894 = vmatpush1.msra.mxu0 0.0
        %895 = vmatprep.subr.mxu0 0.0
        %896 = vmatpush1.msra.mxu0 0.0
        %897 = vmatprep.mubr.f32.mxu0 0.0
        %v898 = vand.u32 %v708, 4294901760
        %899 = vmatmul.mubr.f32.gmra.mrb[0].mxu0 %v898
        %v900 = vpop.f32.mrb[0].mxu0
        %v901 = vadd.f32 %v790, %v900
        %v902 = vpop.f32.mrb[0].mxu0
        %903 = vdwg.mxu0
        %904 = vmatprep.subr.mxu0 0.0
        %v905 = vand.u32 %v140, 4294901760
        %v906 = vsub.f32 %v140, %v905
        %907 = vmatpush1.msra.mxu0 %v906
        %908 = vmatprep.subr.mxu0 0.0
        %v909 = vand.u32 %v141, 4294901760
        %v910 = vsub.f32 %v141, %v909
        %911 = vmatpush1.msra.mxu0 %v910
        %912 = vmatprep.subr.mxu0 0.0
        %v913 = vand.u32 %v142, 4294901760
        %v914 = vsub.f32 %v142, %v913
        %915 = vmatpush1.msra.mxu0 %v914
        %916 = vmatprep.subr.mxu0 0.0
        %v917 = vand.u32 %v143, 4294901760
        %v918 = vsub.f32 %v143, %v917
        %919 = vmatpush1.msra.mxu0 %v918
        %920 = vmatprep.subr.mxu0 0.0
        %v921 = vand.u32 %v144, 4294901760
        %v922 = vsub.f32 %v144, %v921
        %923 = vmatpush1.msra.mxu0 %v922
        %924 = vmatprep.subr.mxu0 0.0
        %v925 = vand.u32 %v145, 4294901760
        %v926 = vsub.f32 %v145, %v925
        %927 = vmatpush1.msra.mxu0 %v926
        %928 = vmatprep.subr.mxu0 0.0
        %v929 = vand.u32 %v146, 4294901760
        %v930 = vsub.f32 %v146, %v929
        %931 = vmatpush1.msra.mxu0 %v930
        %932 = vmatprep.subr.mxu0 0.0
        %v933 = vand.u32 %v162, 4294901760
        %v934 = vsub.f32 %v162, %v933
        %935 = vmatpush1.msra.mxu0 %v934
        %936 = vmatprep.subr.mxu0 0.0
        %937 = vmatpush1.msra.mxu0 0.0
        %938 = vmatprep.subr.mxu0 0.0
        %939 = vmatpush1.msra.mxu0 0.0
        %940 = vmatprep.subr.mxu0 0.0
        %941 = vmatpush1.msra.mxu0 0.0
        %942 = vmatprep.subr.mxu0 0.0
        %943 = vmatpush1.msra.mxu0 0.0
        %944 = vmatprep.subr.mxu0 0.0
        %945 = vmatpush1.msra.mxu0 0.0
        %946 = vmatprep.subr.mxu0 0.0
        %947 = vmatpush1.msra.mxu0 0.0
        %948 = vmatprep.subr.mxu0 0.0
        %949 = vmatpush1.msra.mxu0 0.0
        %950 = vmatprep.subr.mxu0 0.0
        %951 = vmatpush1.msra.mxu0 0.0
        %952 = vmatprep.subr.mxu0 0.0
        %953 = vmatpush1.msra.mxu0 0.0
        %954 = vmatprep.subr.mxu0 0.0
        %955 = vmatpush1.msra.mxu0 0.0
        %956 = vmatprep.subr.mxu0 0.0
        %957 = vmatpush1.msra.mxu0 0.0
        %958 = vmatprep.subr.mxu0 0.0
        %959 = vmatpush1.msra.mxu0 0.0
        %960 = vmatprep.subr.mxu0 0.0
        %961 = vmatpush1.msra.mxu0 0.0
        %962 = vmatprep.subr.mxu0 0.0
        %963 = vmatpush1.msra.mxu0 0.0
        %964 = vmatprep.subr.mxu0 0.0
        %965 = vmatpush1.msra.mxu0 0.0
        %966 = vmatprep.subr.mxu0 0.0
        %967 = vmatpush1.msra.mxu0 0.0
        %968 = vmatprep.subr.mxu0 0.0
        %969 = vmatpush1.msra.mxu0 0.0
        %970 = vmatprep.subr.mxu0 0.0
        %971 = vmatpush1.msra.mxu0 0.0
        %972 = vmatprep.subr.mxu0 0.0
        %973 = vmatpush1.msra.mxu0 0.0
        %974 = vmatprep.subr.mxu0 0.0
        %975 = vmatpush1.msra.mxu0 0.0
        %976 = vmatprep.subr.mxu0 0.0
        %977 = vmatpush1.msra.mxu0 0.0
        %978 = vmatprep.subr.mxu0 0.0
        %979 = vmatpush1.msra.mxu0 0.0
        %980 = vmatprep.subr.mxu0 0.0
        %981 = vmatpush1.msra.mxu0 0.0
        %982 = vmatprep.subr.mxu0 0.0
        %983 = vmatpush1.msra.mxu0 0.0
        %984 = vmatprep.mubr.f32.mxu0 0.0
        %v985 = vand.u32 %v708, 4294901760
        %v986 = vsub.f32 %v708, %v985
        %987 = vmatmul.mubr.f32.gmra.mrb[0].mxu0 %v986
        %v988 = vpop.f32.mrb[0].mxu0
        %v989 = vadd.f32 %v901, %v988
        %v990 = vpop.f32.mrb[0].mxu0
        %991 = vdwg.mxu0
        %992 = vmatprep.subr.mxu0 0.0
        %v993 = vand.u32 %v140, 4294901760
        %994 = vmatpush1.msra.mxu0 %v993
        %995 = vmatprep.subr.mxu0 0.0
        %v996 = vand.u32 %v141, 4294901760
        %997 = vmatpush1.msra.mxu0 %v996
        %998 = vmatprep.subr.mxu0 0.0
        %v999 = vand.u32 %v142, 4294901760
        %1000 = vmatpush1.msra.mxu0 %v999
        %1001 = vmatprep.subr.mxu0 0.0
        %v1002 = vand.u32 %v143, 4294901760
        %1003 = vmatpush1.msra.mxu0 %v1002
        %1004 = vmatprep.subr.mxu0 0.0
        %v1005 = vand.u32 %v144, 4294901760
        %1006 = vmatpush1.msra.mxu0 %v1005
        %1007 = vmatprep.subr.mxu0 0.0
        %v1008 = vand.u32 %v145, 4294901760
        %1009 = vmatpush1.msra.mxu0 %v1008
        %1010 = vmatprep.subr.mxu0 0.0
        %v1011 = vand.u32 %v146, 4294901760
        %1012 = vmatpush1.msra.mxu0 %v1011
        %1013 = vmatprep.subr.mxu0 0.0
        %v1014 = vand.u32 %v162, 4294901760
        %1015 = vmatpush1.msra.mxu0 %v1014
        %1016 = vmatprep.subr.mxu0 0.0
        %1017 = vmatpush1.msra.mxu0 0.0
        %1018 = vmatprep.subr.mxu0 0.0
        %1019 = vmatpush1.msra.mxu0 0.0
        %1020 = vmatprep.subr.mxu0 0.0
        %1021 = vmatpush1.msra.mxu0 0.0
        %1022 = vmatprep.subr.mxu0 0.0
        %1023 = vmatpush1.msra.mxu0 0.0
        %1024 = vmatprep.subr.mxu0 0.0
        %1025 = vmatpush1.msra.mxu0 0.0
        %1026 = vmatprep.subr.mxu0 0.0
        %1027 = vmatpush1.msra.mxu0 0.0
        %1028 = vmatprep.subr.mxu0 0.0
        %1029 = vmatpush1.msra.mxu0 0.0
        %1030 = vmatprep.subr.mxu0 0.0
        %1031 = vmatpush1.msra.mxu0 0.0
        %1032 = vmatprep.subr.mxu0 0.0
        %1033 = vmatpush1.msra.mxu0 0.0
        %1034 = vmatprep.subr.mxu0 0.0
        %1035 = vmatpush1.msra.mxu0 0.0
        %1036 = vmatprep.subr.mxu0 0.0
        %1037 = vmatpush1.msra.mxu0 0.0
        %1038 = vmatprep.subr.mxu0 0.0
        %1039 = vmatpush1.msra.mxu0 0.0
        %1040 = vmatprep.subr.mxu0 0.0
        %1041 = vmatpush1.msra.mxu0 0.0
        %1042 = vmatprep.subr.mxu0 0.0
        %1043 = vmatpush1.msra.mxu0 0.0
        %1044 = vmatprep.subr.mxu0 0.0
        %1045 = vmatpush1.msra.mxu0 0.0
        %1046 = vmatprep.subr.mxu0 0.0
        %1047 = vmatpush1.msra.mxu0 0.0
        %1048 = vmatprep.subr.mxu0 0.0
        %1049 = vmatpush1.msra.mxu0 0.0
        %1050 = vmatprep.subr.mxu0 0.0
        %1051 = vmatpush1.msra.mxu0 0.0
        %1052 = vmatprep.subr.mxu0 0.0
        %1053 = vmatpush1.msra.mxu0 0.0
        %1054 = vmatprep.subr.mxu0 0.0
        %1055 = vmatpush1.msra.mxu0 0.0
        %1056 = vmatprep.subr.mxu0 0.0
        %1057 = vmatpush1.msra.mxu0 0.0
        %1058 = vmatprep.subr.mxu0 0.0
        %1059 = vmatpush1.msra.mxu0 0.0
        %1060 = vmatprep.subr.mxu0 0.0
        %1061 = vmatpush1.msra.mxu0 0.0
        %1062 = vmatprep.subr.mxu0 0.0
        %1063 = vmatpush1.msra.mxu0 0.0
        %1064 = vmatprep.mubr.f32.mxu0 0.0
        %v1065 = vand.u32 %v708, 4294901760
        %v1066 = vsub.f32 %v708, %v1065
        %v1067 = vand.u32 %v1066, 4294901760
        %1068 = vmatmul.mubr.f32.gmra.mrb[0].mxu0 %v1067
        %v1069 = vpop.f32.mrb[0].mxu0
        %v1070 = vadd.f32 %v989, %v1069
        %v1071 = vpop.f32.mrb[0].mxu0
        %1072 = vdwg.mxu0
        %1073 = vmatprep.subr.mxu0 0.0
        %v1074 = vand.u32 %v140, 4294901760
        %v1075 = vsub.f32 %v140, %v1074
        %v1076 = vand.u32 %v1075, 4294901760
        %1077 = vmatpush1.msra.mxu0 %v1076
        %1078 = vmatprep.subr.mxu0 0.0
        %v1079 = vand.u32 %v141, 4294901760
        %v1080 = vsub.f32 %v141, %v1079
        %v1081 = vand.u32 %v1080, 4294901760
        %1082 = vmatpush1.msra.mxu0 %v1081
        %1083 = vmatprep.subr.mxu0 0.0
        %v1084 = vand.u32 %v142, 4294901760
        %v1085 = vsub.f32 %v142, %v1084
        %v1086 = vand.u32 %v1085, 4294901760
        %1087 = vmatpush1.msra.mxu0 %v1086
        %1088 = vmatprep.subr.mxu0 0.0
        %v1089 = vand.u32 %v143, 4294901760
        %v1090 = vsub.f32 %v143, %v1089
        %v1091 = vand.u32 %v1090, 4294901760
        %1092 = vmatpush1.msra.mxu0 %v1091
        %1093 = vmatprep.subr.mxu0 0.0
        %v1094 = vand.u32 %v144, 4294901760
        %v1095 = vsub.f32 %v144, %v1094
        %v1096 = vand.u32 %v1095, 4294901760
        %1097 = vmatpush1.msra.mxu0 %v1096
        %1098 = vmatprep.subr.mxu0 0.0
        %v1099 = vand.u32 %v145, 4294901760
        %v1100 = vsub.f32 %v145, %v1099
        %v1101 = vand.u32 %v1100, 4294901760
        %1102 = vmatpush1.msra.mxu0 %v1101
        %1103 = vmatprep.subr.mxu0 0.0
        %v1104 = vand.u32 %v146, 4294901760
        %v1105 = vsub.f32 %v146, %v1104
        %v1106 = vand.u32 %v1105, 4294901760
        %1107 = vmatpush1.msra.mxu0 %v1106
        %1108 = vmatprep.subr.mxu0 0.0
        %v1109 = vand.u32 %v162, 4294901760
        %v1110 = vsub.f32 %v162, %v1109
        %v1111 = vand.u32 %v1110, 4294901760
        %1112 = vmatpush1.msra.mxu0 %v1111
        %1113 = vmatprep.subr.mxu0 0.0
        %1114 = vmatpush1.msra.mxu0 0.0
        %1115 = vmatprep.subr.mxu0 0.0
        %1116 = vmatpush1.msra.mxu0 0.0
        %1117 = vmatprep.subr.mxu0 0.0
        %1118 = vmatpush1.msra.mxu0 0.0
        %1119 = vmatprep.subr.mxu0 0.0
        %1120 = vmatpush1.msra.mxu0 0.0
        %1121 = vmatprep.subr.mxu0 0.0
        %1122 = vmatpush1.msra.mxu0 0.0
        %1123 = vmatprep.subr.mxu0 0.0
        %1124 = vmatpush1.msra.mxu0 0.0
        %1125 = vmatprep.subr.mxu0 0.0
        %1126 = vmatpush1.msra.mxu0 0.0
        %1127 = vmatprep.subr.mxu0 0.0
        %1128 = vmatpush1.msra.mxu0 0.0
        %1129 = vmatprep.subr.mxu0 0.0
        %1130 = vmatpush1.msra.mxu0 0.0
        %1131 = vmatprep.subr.mxu0 0.0
        %1132 = vmatpush1.msra.mxu0 0.0
        %1133 = vmatprep.subr.mxu0 0.0
        %1134 = vmatpush1.msra.mxu0 0.0
        %1135 = vmatprep.subr.mxu0 0.0
        %1136 = vmatpush1.msra.mxu0 0.0
        %1137 = vmatprep.subr.mxu0 0.0
        %1138 = vmatpush1.msra.mxu0 0.0
        %1139 = vmatprep.subr.mxu0 0.0
        %1140 = vmatpush1.msra.mxu0 0.0
        %1141 = vmatprep.subr.mxu0 0.0
        %1142 = vmatpush1.msra.mxu0 0.0
        %1143 = vmatprep.subr.mxu0 0.0
        %1144 = vmatpush1.msra.mxu0 0.0
        %1145 = vmatprep.subr.mxu0 0.0
        %1146 = vmatpush1.msra.mxu0 0.0
        %1147 = vmatprep.subr.mxu0 0.0
        %1148 = vmatpush1.msra.mxu0 0.0
        %1149 = vmatprep.subr.mxu0 0.0
        %1150 = vmatpush1.msra.mxu0 0.0
        %1151 = vmatprep.subr.mxu0 0.0
        %1152 = vmatpush1.msra.mxu0 0.0
        %1153 = vmatprep.subr.mxu0 0.0
        %1154 = vmatpush1.msra.mxu0 0.0
        %1155 = vmatprep.subr.mxu0 0.0
        %1156 = vmatpush1.msra.mxu0 0.0
        %1157 = vmatprep.subr.mxu0 0.0
        %1158 = vmatpush1.msra.mxu0 0.0
        %1159 = vmatprep.subr.mxu0 0.0
        %1160 = vmatpush1.msra.mxu0 0.0
        %1161 = vmatprep.mubr.f32.mxu0 0.0
        %v1162 = vand.u32 %v708, 4294901760
        %1163 = vmatmul.mubr.f32.gmra.mrb[0].mxu0 %v1162
        %v1164 = vpop.f32.mrb[0].mxu0
        %v1165 = vadd.f32 %v1070, %v1164
        %v1166 = vpop.f32.mrb[0].mxu0
        %1167 = vdwg.mxu0
        %1168 = vmatprep.subr.mxu0 0.0
        %v1169 = vand.u32 %v140, 4294901760
        %1170 = vmatpush1.msra.mxu0 %v1169
        %1171 = vmatprep.subr.mxu0 0.0
        %v1172 = vand.u32 %v141, 4294901760
        %1173 = vmatpush1.msra.mxu0 %v1172
        %1174 = vmatprep.subr.mxu0 0.0
        %v1175 = vand.u32 %v142, 4294901760
        %1176 = vmatpush1.msra.mxu0 %v1175
        %1177 = vmatprep.subr.mxu0 0.0
        %v1178 = vand.u32 %v143, 4294901760
        %1179 = vmatpush1.msra.mxu0 %v1178
        %1180 = vmatprep.subr.mxu0 0.0
        %v1181 = vand.u32 %v144, 4294901760
        %1182 = vmatpush1.msra.mxu0 %v1181
        %1183 = vmatprep.subr.mxu0 0.0
        %v1184 = vand.u32 %v145, 4294901760
        %1185 = vmatpush1.msra.mxu0 %v1184
        %1186 = vmatprep.subr.mxu0 0.0
        %v1187 = vand.u32 %v146, 4294901760
        %1188 = vmatpush1.msra.mxu0 %v1187
        %1189 = vmatprep.subr.mxu0 0.0
        %v1190 = vand.u32 %v162, 4294901760
        %1191 = vmatpush1.msra.mxu0 %v1190
        %1192 = vmatprep.subr.mxu0 0.0
        %1193 = vmatpush1.msra.mxu0 0.0
        %1194 = vmatprep.subr.mxu0 0.0
        %1195 = vmatpush1.msra.mxu0 0.0
        %1196 = vmatprep.subr.mxu0 0.0
        %1197 = vmatpush1.msra.mxu0 0.0
        %1198 = vmatprep.subr.mxu0 0.0
        %1199 = vmatpush1.msra.mxu0 0.0
        %1200 = vmatprep.subr.mxu0 0.0
        %1201 = vmatpush1.msra.mxu0 0.0
        %1202 = vmatprep.subr.mxu0 0.0
        %1203 = vmatpush1.msra.mxu0 0.0
        %1204 = vmatprep.subr.mxu0 0.0
        %1205 = vmatpush1.msra.mxu0 0.0
        %1206 = vmatprep.subr.mxu0 0.0
        %1207 = vmatpush1.msra.mxu0 0.0
        %1208 = vmatprep.subr.mxu0 0.0
        %1209 = vmatpush1.msra.mxu0 0.0
        %1210 = vmatprep.subr.mxu0 0.0
        %1211 = vmatpush1.msra.mxu0 0.0
        %1212 = vmatprep.subr.mxu0 0.0
        %1213 = vmatpush1.msra.mxu0 0.0
        %1214 = vmatprep.subr.mxu0 0.0
        %1215 = vmatpush1.msra.mxu0 0.0
        %1216 = vmatprep.subr.mxu0 0.0
        %1217 = vmatpush1.msra.mxu0 0.0
        %1218 = vmatprep.subr.mxu0 0.0
        %1219 = vmatpush1.msra.mxu0 0.0
        %1220 = vmatprep.subr.mxu0 0.0
        %1221 = vmatpush1.msra.mxu0 0.0
        %1222 = vmatprep.subr.mxu0 0.0
        %1223 = vmatpush1.msra.mxu0 0.0
        %1224 = vmatprep.subr.mxu0 0.0
        %1225 = vmatpush1.msra.mxu0 0.0
        %1226 = vmatprep.subr.mxu0 0.0
        %1227 = vmatpush1.msra.mxu0 0.0
        %1228 = vmatprep.subr.mxu0 0.0
        %1229 = vmatpush1.msra.mxu0 0.0
        %1230 = vmatprep.subr.mxu0 0.0
        %1231 = vmatpush1.msra.mxu0 0.0
        %1232 = vmatprep.subr.mxu0 0.0
        %1233 = vmatpush1.msra.mxu0 0.0
        %1234 = vmatprep.subr.mxu0 0.0
        %1235 = vmatpush1.msra.mxu0 0.0
        %1236 = vmatprep.subr.mxu0 0.0
        %1237 = vmatpush1.msra.mxu0 0.0
        %1238 = vmatprep.subr.mxu0 0.0
        %1239 = vmatpush1.msra.mxu0 0.0
        %1240 = vmatprep.mubr.f32.mxu0 0.0
        %v1241 = vand.u32 %v708, 4294901760
        %1242 = vmatmul.mubr.f32.gmra.mrb[0].mxu0 %v1241
        %v1243 = vpop.f32.mrb[0].mxu0
        %v1244 = vadd.f32 %v1165, %v1243
        %v1245 = vpop.f32.mrb[0].mxu0
        %1246 = vdwg.mxu0
        %1247 = vset.pattern.permute.xlu0 2
        %1248 = vperm.xlu0 %1247, %v139
        %v1249 = vpop.permute.xlu0 %1248
        %vm1250 = vcmp.eq.s32.totalorder %v149, %v1249
        %v1251 = vsel %vm1250, 1, 0
        %v1252 = vcvt.s32.f32 %v1251
        %v1254 = vsel %vm156, %v1252, 0
        %1256 = vmatprep.subr.mxu0 0.0
        %v1257 = vand.u32 %v140, 4294901760
        %1258 = vmatpush1.msra.mxu0 %v1257
        %1259 = vmatprep.subr.mxu0 0.0
        %v1260 = vand.u32 %v141, 4294901760
        %1261 = vmatpush1.msra.mxu0 %v1260
        %1262 = vmatprep.subr.mxu0 0.0
        %v1263 = vand.u32 %v142, 4294901760
        %1264 = vmatpush1.msra.mxu0 %v1263
        %1265 = vmatprep.subr.mxu0 0.0
        %v1266 = vand.u32 %v143, 4294901760
        %1267 = vmatpush1.msra.mxu0 %v1266
        %1268 = vmatprep.subr.mxu0 0.0
        %v1269 = vand.u32 %v144, 4294901760
        %1270 = vmatpush1.msra.mxu0 %v1269
        %1271 = vmatprep.subr.mxu0 0.0
        %v1272 = vand.u32 %v145, 4294901760
        %1273 = vmatpush1.msra.mxu0 %v1272
        %1274 = vmatprep.subr.mxu0 0.0
        %v1275 = vand.u32 %v146, 4294901760
        %1276 = vmatpush1.msra.mxu0 %v1275
        %1277 = vmatprep.subr.mxu0 0.0
        %v1278 = vand.u32 %v162, 4294901760
        %1279 = vmatpush1.msra.mxu0 %v1278
        %1280 = vmatprep.subr.mxu0 0.0
        %1281 = vmatpush1.msra.mxu0 0.0
        %1282 = vmatprep.subr.mxu0 0.0
        %1283 = vmatpush1.msra.mxu0 0.0
        %1284 = vmatprep.subr.mxu0 0.0
        %1285 = vmatpush1.msra.mxu0 0.0
        %1286 = vmatprep.subr.mxu0 0.0
        %1287 = vmatpush1.msra.mxu0 0.0
        %1288 = vmatprep.subr.mxu0 0.0
        %1289 = vmatpush1.msra.mxu0 0.0
        %1290 = vmatprep.subr.mxu0 0.0
        %1291 = vmatpush1.msra.mxu0 0.0
        %1292 = vmatprep.subr.mxu0 0.0
        %1293 = vmatpush1.msra.mxu0 0.0
        %1294 = vmatprep.subr.mxu0 0.0
        %1295 = vmatpush1.msra.mxu0 0.0
        %1296 = vmatprep.subr.mxu0 0.0
        %1297 = vmatpush1.msra.mxu0 0.0
        %1298 = vmatprep.subr.mxu0 0.0
        %1299 = vmatpush1.msra.mxu0 0.0
        %1300 = vmatprep.subr.mxu0 0.0
        %1301 = vmatpush1.msra.mxu0 0.0
        %1302 = vmatprep.subr.mxu0 0.0
        %1303 = vmatpush1.msra.mxu0 0.0
        %1304 = vmatprep.subr.mxu0 0.0
        %1305 = vmatpush1.msra.mxu0 0.0
        %1306 = vmatprep.subr.mxu0 0.0
        %1307 = vmatpush1.msra.mxu0 0.0
        %1308 = vmatprep.subr.mxu0 0.0
        %1309 = vmatpush1.msra.mxu0 0.0
        %1310 = vmatprep.subr.mxu0 0.0
        %1311 = vmatpush1.msra.mxu0 0.0
        %1312 = vmatprep.subr.mxu0 0.0
        %1313 = vmatpush1.msra.mxu0 0.0
        %1314 = vmatprep.subr.mxu0 0.0
        %1315 = vmatpush1.msra.mxu0 0.0
        %1316 = vmatprep.subr.mxu0 0.0
        %1317 = vmatpush1.msra.mxu0 0.0
        %1318 = vmatprep.subr.mxu0 0.0
        %1319 = vmatpush1.msra.mxu0 0.0
        %1320 = vmatprep.subr.mxu0 0.0
        %1321 = vmatpush1.msra.mxu0 0.0
        %1322 = vmatprep.subr.mxu0 0.0
        %1323 = vmatpush1.msra.mxu0 0.0
        %1324 = vmatprep.subr.mxu0 0.0
        %1325 = vmatpush1.msra.mxu0 0.0
        %1326 = vmatprep.subr.mxu0 0.0
        %1327 = vmatpush1.msra.mxu0 0.0
        %1328 = vmatprep.mubr.f32.mxu0 0.0
        %v1329 = vand.u32 %v1254, 4294901760
        %v1330 = vsub.f32 %v1254, %v1329
        %v1331 = vand.u32 %v1330, 4294901760
        %v1332 = vsub.f32 %v1330, %v1331
        %v1333 = vand.u32 %v1332, 4294901760
        %1334 = vmatmul.mubr.f32.gmra.mrb[0].mxu0 %v1333
        %v1335 = vpop.f32.mrb[0].mxu0
        %v1336 = vadd.f32 0.0, %v1335
        %v1337 = vpop.f32.mrb[0].mxu0
        %1338 = vdwg.mxu0
        %1339 = vmatprep.subr.mxu0 0.0
        %v1340 = vand.u32 %v140, 4294901760
        %v1341 = vsub.f32 %v140, %v1340
        %v1342 = vand.u32 %v1341, 4294901760
        %v1343 = vsub.f32 %v1341, %v1342
        %v1344 = vand.u32 %v1343, 4294901760
        %1345 = vmatpush1.msra.mxu0 %v1344
        %1346 = vmatprep.subr.mxu0 0.0
        %v1347 = vand.u32 %v141, 4294901760
        %v1348 = vsub.f32 %v141, %v1347
        %v1349 = vand.u32 %v1348, 4294901760
        %v1350 = vsub.f32 %v1348, %v1349
        %v1351 = vand.u32 %v1350, 4294901760
        %1352 = vmatpush1.msra.mxu0 %v1351
        %1353 = vmatprep.subr.mxu0 0.0
        %v1354 = vand.u32 %v142, 4294901760
        %v1355 = vsub.f32 %v142, %v1354
        %v1356 = vand.u32 %v1355, 4294901760
        %v1357 = vsub.f32 %v1355, %v1356
        %v1358 = vand.u32 %v1357, 4294901760
        %1359 = vmatpush1.msra.mxu0 %v1358
        %1360 = vmatprep.subr.mxu0 0.0
        %v1361 = vand.u32 %v143, 4294901760
        %v1362 = vsub.f32 %v143, %v1361
        %v1363 = vand.u32 %v1362, 4294901760
        %v1364 = vsub.f32 %v1362, %v1363
        %v1365 = vand.u32 %v1364, 4294901760
        %1366 = vmatpush1.msra.mxu0 %v1365
        %1367 = vmatprep.subr.mxu0 0.0
        %v1368 = vand.u32 %v144, 4294901760
        %v1369 = vsub.f32 %v144, %v1368
        %v1370 = vand.u32 %v1369, 4294901760
        %v1371 = vsub.f32 %v1369, %v1370
        %v1372 = vand.u32 %v1371, 4294901760
        %1373 = vmatpush1.msra.mxu0 %v1372
        %1374 = vmatprep.subr.mxu0 0.0
        %v1375 = vand.u32 %v145, 4294901760
        %v1376 = vsub.f32 %v145, %v1375
        %v1377 = vand.u32 %v1376, 4294901760
        %v1378 = vsub.f32 %v1376, %v1377
        %v1379 = vand.u32 %v1378, 4294901760
        %1380 = vmatpush1.msra.mxu0 %v1379
        %1381 = vmatprep.subr.mxu0 0.0
        %v1382 = vand.u32 %v146, 4294901760
        %v1383 = vsub.f32 %v146, %v1382
        %v1384 = vand.u32 %v1383, 4294901760
        %v1385 = vsub.f32 %v1383, %v1384
        %v1386 = vand.u32 %v1385, 4294901760
        %1387 = vmatpush1.msra.mxu0 %v1386
        %1388 = vmatprep.subr.mxu0 0.0
        %v1389 = vand.u32 %v162, 4294901760
        %v1390 = vsub.f32 %v162, %v1389
        %v1391 = vand.u32 %v1390, 4294901760
        %v1392 = vsub.f32 %v1390, %v1391
        %v1393 = vand.u32 %v1392, 4294901760
        %1394 = vmatpush1.msra.mxu0 %v1393
        %1395 = vmatprep.subr.mxu0 0.0
        %1396 = vmatpush1.msra.mxu0 0.0
        %1397 = vmatprep.subr.mxu0 0.0
        %1398 = vmatpush1.msra.mxu0 0.0
        %1399 = vmatprep.subr.mxu0 0.0
        %1400 = vmatpush1.msra.mxu0 0.0
        %1401 = vmatprep.subr.mxu0 0.0
        %1402 = vmatpush1.msra.mxu0 0.0
        %1403 = vmatprep.subr.mxu0 0.0
        %1404 = vmatpush1.msra.mxu0 0.0
        %1405 = vmatprep.subr.mxu0 0.0
        %1406 = vmatpush1.msra.mxu0 0.0
        %1407 = vmatprep.subr.mxu0 0.0
        %1408 = vmatpush1.msra.mxu0 0.0
        %1409 = vmatprep.subr.mxu0 0.0
        %1410 = vmatpush1.msra.mxu0 0.0
        %1411 = vmatprep.subr.mxu0 0.0
        %1412 = vmatpush1.msra.mxu0 0.0
        %1413 = vmatprep.subr.mxu0 0.0
        %1414 = vmatpush1.msra.mxu0 0.0
        %1415 = vmatprep.subr.mxu0 0.0
        %1416 = vmatpush1.msra.mxu0 0.0
        %1417 = vmatprep.subr.mxu0 0.0
        %1418 = vmatpush1.msra.mxu0 0.0
        %1419 = vmatprep.subr.mxu0 0.0
        %1420 = vmatpush1.msra.mxu0 0.0
        %1421 = vmatprep.subr.mxu0 0.0
        %1422 = vmatpush1.msra.mxu0 0.0
        %1423 = vmatprep.subr.mxu0 0.0
        %1424 = vmatpush1.msra.mxu0 0.0
        %1425 = vmatprep.subr.mxu0 0.0
        %1426 = vmatpush1.msra.mxu0 0.0
        %1427 = vmatprep.subr.mxu0 0.0
        %1428 = vmatpush1.msra.mxu0 0.0
        %1429 = vmatprep.subr.mxu0 0.0
        %1430 = vmatpush1.msra.mxu0 0.0
        %1431 = vmatprep.subr.mxu0 0.0
        %1432 = vmatpush1.msra.mxu0 0.0
        %1433 = vmatprep.subr.mxu0 0.0
        %1434 = vmatpush1.msra.mxu0 0.0
        %1435 = vmatprep.subr.mxu0 0.0
        %1436 = vmatpush1.msra.mxu0 0.0
        %1437 = vmatprep.subr.mxu0 0.0
        %1438 = vmatpush1.msra.mxu0 0.0
        %1439 = vmatprep.subr.mxu0 0.0
        %1440 = vmatpush1.msra.mxu0 0.0
        %1441 = vmatprep.subr.mxu0 0.0
        %1442 = vmatpush1.msra.mxu0 0.0
        %1443 = vmatprep.mubr.f32.mxu0 0.0
        %v1444 = vand.u32 %v1254, 4294901760
        %1445 = vmatmul.mubr.f32.gmra.mrb[0].mxu0 %v1444
        %v1446 = vpop.f32.mrb[0].mxu0
        %v1447 = vadd.f32 %v1336, %v1446
        %v1448 = vpop.f32.mrb[0].mxu0
        %1449 = vdwg.mxu0
        %1450 = vmatprep.subr.mxu0 0.0
        %v1451 = vand.u32 %v140, 4294901760
        %v1452 = vsub.f32 %v140, %v1451
        %1453 = vmatpush1.msra.mxu0 %v1452
        %1454 = vmatprep.subr.mxu0 0.0
        %v1455 = vand.u32 %v141, 4294901760
        %v1456 = vsub.f32 %v141, %v1455
        %1457 = vmatpush1.msra.mxu0 %v1456
        %1458 = vmatprep.subr.mxu0 0.0
        %v1459 = vand.u32 %v142, 4294901760
        %v1460 = vsub.f32 %v142, %v1459
        %1461 = vmatpush1.msra.mxu0 %v1460
        %1462 = vmatprep.subr.mxu0 0.0
        %v1463 = vand.u32 %v143, 4294901760
        %v1464 = vsub.f32 %v143, %v1463
        %1465 = vmatpush1.msra.mxu0 %v1464
        %1466 = vmatprep.subr.mxu0 0.0
        %v1467 = vand.u32 %v144, 4294901760
        %v1468 = vsub.f32 %v144, %v1467
        %1469 = vmatpush1.msra.mxu0 %v1468
        %1470 = vmatprep.subr.mxu0 0.0
        %v1471 = vand.u32 %v145, 4294901760
        %v1472 = vsub.f32 %v145, %v1471
        %1473 = vmatpush1.msra.mxu0 %v1472
        %1474 = vmatprep.subr.mxu0 0.0
        %v1475 = vand.u32 %v146, 4294901760
        %v1476 = vsub.f32 %v146, %v1475
        %1477 = vmatpush1.msra.mxu0 %v1476
        %1478 = vmatprep.subr.mxu0 0.0
        %v1479 = vand.u32 %v162, 4294901760
        %v1480 = vsub.f32 %v162, %v1479
        %1481 = vmatpush1.msra.mxu0 %v1480
        %1482 = vmatprep.subr.mxu0 0.0
        %1483 = vmatpush1.msra.mxu0 0.0
        %1484 = vmatprep.subr.mxu0 0.0
        %1485 = vmatpush1.msra.mxu0 0.0
        %1486 = vmatprep.subr.mxu0 0.0
        %1487 = vmatpush1.msra.mxu0 0.0
        %1488 = vmatprep.subr.mxu0 0.0
        %1489 = vmatpush1.msra.mxu0 0.0
        %1490 = vmatprep.subr.mxu0 0.0
        %1491 = vmatpush1.msra.mxu0 0.0
        %1492 = vmatprep.subr.mxu0 0.0
        %1493 = vmatpush1.msra.mxu0 0.0
        %1494 = vmatprep.subr.mxu0 0.0
        %1495 = vmatpush1.msra.mxu0 0.0
        %1496 = vmatprep.subr.mxu0 0.0
        %1497 = vmatpush1.msra.mxu0 0.0
        %1498 = vmatprep.subr.mxu0 0.0
        %1499 = vmatpush1.msra.mxu0 0.0
        %1500 = vmatprep.subr.mxu0 0.0
        %1501 = vmatpush1.msra.mxu0 0.0
        %1502 = vmatprep.subr.mxu0 0.0
        %1503 = vmatpush1.msra.mxu0 0.0
        %1504 = vmatprep.subr.mxu0 0.0
        %1505 = vmatpush1.msra.mxu0 0.0
        %1506 = vmatprep.subr.mxu0 0.0
        %1507 = vmatpush1.msra.mxu0 0.0
        %1508 = vmatprep.subr.mxu0 0.0
        %1509 = vmatpush1.msra.mxu0 0.0
        %1510 = vmatprep.subr.mxu0 0.0
        %1511 = vmatpush1.msra.mxu0 0.0
        %1512 = vmatprep.subr.mxu0 0.0
        %1513 = vmatpush1.msra.mxu0 0.0
        %1514 = vmatprep.subr.mxu0 0.0
        %1515 = vmatpush1.msra.mxu0 0.0
        %1516 = vmatprep.subr.mxu0 0.0
        %1517 = vmatpush1.msra.mxu0 0.0
        %1518 = vmatprep.subr.mxu0 0.0
        %1519 = vmatpush1.msra.mxu0 0.0
        %1520 = vmatprep.subr.mxu0 0.0
        %1521 = vmatpush1.msra.mxu0 0.0
        %1522 = vmatprep.subr.mxu0 0.0
        %1523 = vmatpush1.msra.mxu0 0.0
        %1524 = vmatprep.subr.mxu0 0.0
        %1525 = vmatpush1.msra.mxu0 0.0
        %1526 = vmatprep.subr.mxu0 0.0
        %1527 = vmatpush1.msra.mxu0 0.0
        %1528 = vmatprep.subr.mxu0 0.0
        %1529 = vmatpush1.msra.mxu0 0.0
        %1530 = vmatprep.mubr.f32.mxu0 0.0
        %v1531 = vand.u32 %v1254, 4294901760
        %v1532 = vsub.f32 %v1254, %v1531
        %1533 = vmatmul.mubr.f32.gmra.mrb[0].mxu0 %v1532
        %v1534 = vpop.f32.mrb[0].mxu0
        %v1535 = vadd.f32 %v1447, %v1534
        %v1536 = vpop.f32.mrb[0].mxu0
        %1537 = vdwg.mxu0
        %1538 = vmatprep.subr.mxu0 0.0
        %v1539 = vand.u32 %v140, 4294901760
        %1540 = vmatpush1.msra.mxu0 %v1539
        %1541 = vmatprep.subr.mxu0 0.0
        %v1542 = vand.u32 %v141, 4294901760
        %1543 = vmatpush1.msra.mxu0 %v1542
        %1544 = vmatprep.subr.mxu0 0.0
        %v1545 = vand.u32 %v142, 4294901760
        %1546 = vmatpush1.msra.mxu0 %v1545
        %1547 = vmatprep.subr.mxu0 0.0
        %v1548 = vand.u32 %v143, 4294901760
        %1549 = vmatpush1.msra.mxu0 %v1548
        %1550 = vmatprep.subr.mxu0 0.0
        %v1551 = vand.u32 %v144, 4294901760
        %1552 = vmatpush1.msra.mxu0 %v1551
        %1553 = vmatprep.subr.mxu0 0.0
        %v1554 = vand.u32 %v145, 4294901760
        %1555 = vmatpush1.msra.mxu0 %v1554
        %1556 = vmatprep.subr.mxu0 0.0
        %v1557 = vand.u32 %v146, 4294901760
        %1558 = vmatpush1.msra.mxu0 %v1557
        %1559 = vmatprep.subr.mxu0 0.0
        %v1560 = vand.u32 %v162, 4294901760
        %1561 = vmatpush1.msra.mxu0 %v1560
        %1562 = vmatprep.subr.mxu0 0.0
        %1563 = vmatpush1.msra.mxu0 0.0
        %1564 = vmatprep.subr.mxu0 0.0
        %1565 = vmatpush1.msra.mxu0 0.0
        %1566 = vmatprep.subr.mxu0 0.0
        %1567 = vmatpush1.msra.mxu0 0.0
        %1568 = vmatprep.subr.mxu0 0.0
        %1569 = vmatpush1.msra.mxu0 0.0
        %1570 = vmatprep.subr.mxu0 0.0
        %1571 = vmatpush1.msra.mxu0 0.0
        %1572 = vmatprep.subr.mxu0 0.0
        %1573 = vmatpush1.msra.mxu0 0.0
        %1574 = vmatprep.subr.mxu0 0.0
        %1575 = vmatpush1.msra.mxu0 0.0
        %1576 = vmatprep.subr.mxu0 0.0
        %1577 = vmatpush1.msra.mxu0 0.0
        %1578 = vmatprep.subr.mxu0 0.0
        %1579 = vmatpush1.msra.mxu0 0.0
        %1580 = vmatprep.subr.mxu0 0.0
        %1581 = vmatpush1.msra.mxu0 0.0
        %1582 = vmatprep.subr.mxu0 0.0
        %1583 = vmatpush1.msra.mxu0 0.0
        %1584 = vmatprep.subr.mxu0 0.0
        %1585 = vmatpush1.msra.mxu0 0.0
        %1586 = vmatprep.subr.mxu0 0.0
        %1587 = vmatpush1.msra.mxu0 0.0
        %1588 = vmatprep.subr.mxu0 0.0
        %1589 = vmatpush1.msra.mxu0 0.0
        %1590 = vmatprep.subr.mxu0 0.0
        %1591 = vmatpush1.msra.mxu0 0.0
        %1592 = vmatprep.subr.mxu0 0.0
        %1593 = vmatpush1.msra.mxu0 0.0
        %1594 = vmatprep.subr.mxu0 0.0
        %1595 = vmatpush1.msra.mxu0 0.0
        %1596 = vmatprep.subr.mxu0 0.0
        %1597 = vmatpush1.msra.mxu0 0.0
        %1598 = vmatprep.subr.mxu0 0.0
        %1599 = vmatpush1.msra.mxu0 0.0
        %1600 = vmatprep.subr.mxu0 0.0
        %1601 = vmatpush1.msra.mxu0 0.0
        %1602 = vmatprep.subr.mxu0 0.0
        %1603 = vmatpush1.msra.mxu0 0.0
        %1604 = vmatprep.subr.mxu0 0.0
        %1605 = vmatpush1.msra.mxu0 0.0
        %1606 = vmatprep.subr.mxu0 0.0
        %1607 = vmatpush1.msra.mxu0 0.0
        %1608 = vmatprep.subr.mxu0 0.0
        %1609 = vmatpush1.msra.mxu0 0.0
        %1610 = vmatprep.mubr.f32.mxu0 0.0
        %v1611 = vand.u32 %v1254, 4294901760
        %v1612 = vsub.f32 %v1254, %v1611
        %v1613 = vand.u32 %v1612, 4294901760
        %1614 = vmatmul.mubr.f32.gmra.mrb[0].mxu0 %v1613
        %v1615 = vpop.f32.mrb[0].mxu0
        %v1616 = vadd.f32 %v1535, %v1615
        %v1617 = vpop.f32.mrb[0].mxu0
        %1618 = vdwg.mxu0
        %1619 = vmatprep.subr.mxu0 0.0
        %v1620 = vand.u32 %v140, 4294901760
        %v1621 = vsub.f32 %v140, %v1620
        %v1622 = vand.u32 %v1621, 4294901760
        %1623 = vmatpush1.msra.mxu0 %v1622
        %1624 = vmatprep.subr.mxu0 0.0
        %v1625 = vand.u32 %v141, 4294901760
        %v1626 = vsub.f32 %v141, %v1625
        %v1627 = vand.u32 %v1626, 4294901760
        %1628 = vmatpush1.msra.mxu0 %v1627
        %1629 = vmatprep.subr.mxu0 0.0
        %v1630 = vand.u32 %v142, 4294901760
        %v1631 = vsub.f32 %v142, %v1630
        %v1632 = vand.u32 %v1631, 4294901760
        %1633 = vmatpush1.msra.mxu0 %v1632
        %1634 = vmatprep.subr.mxu0 0.0
        %v1635 = vand.u32 %v143, 4294901760
        %v1636 = vsub.f32 %v143, %v1635
        %v1637 = vand.u32 %v1636, 4294901760
        %1638 = vmatpush1.msra.mxu0 %v1637
        %1639 = vmatprep.subr.mxu0 0.0
        %v1640 = vand.u32 %v144, 4294901760
        %v1641 = vsub.f32 %v144, %v1640
        %v1642 = vand.u32 %v1641, 4294901760
        %1643 = vmatpush1.msra.mxu0 %v1642
        %1644 = vmatprep.subr.mxu0 0.0
        %v1645 = vand.u32 %v145, 4294901760
        %v1646 = vsub.f32 %v145, %v1645
        %v1647 = vand.u32 %v1646, 4294901760
        %1648 = vmatpush1.msra.mxu0 %v1647
        %1649 = vmatprep.subr.mxu0 0.0
        %v1650 = vand.u32 %v146, 4294901760
        %v1651 = vsub.f32 %v146, %v1650
        %v1652 = vand.u32 %v1651, 4294901760
        %1653 = vmatpush1.msra.mxu0 %v1652
        %1654 = vmatprep.subr.mxu0 0.0
        %v1655 = vand.u32 %v162, 4294901760
        %v1656 = vsub.f32 %v162, %v1655
        %v1657 = vand.u32 %v1656, 4294901760
        %1658 = vmatpush1.msra.mxu0 %v1657
        %1659 = vmatprep.subr.mxu0 0.0
        %1660 = vmatpush1.msra.mxu0 0.0
        %1661 = vmatprep.subr.mxu0 0.0
        %1662 = vmatpush1.msra.mxu0 0.0
        %1663 = vmatprep.subr.mxu0 0.0
        %1664 = vmatpush1.msra.mxu0 0.0
        %1665 = vmatprep.subr.mxu0 0.0
        %1666 = vmatpush1.msra.mxu0 0.0
        %1667 = vmatprep.subr.mxu0 0.0
        %1668 = vmatpush1.msra.mxu0 0.0
        %1669 = vmatprep.subr.mxu0 0.0
        %1670 = vmatpush1.msra.mxu0 0.0
        %1671 = vmatprep.subr.mxu0 0.0
        %1672 = vmatpush1.msra.mxu0 0.0
        %1673 = vmatprep.subr.mxu0 0.0
        %1674 = vmatpush1.msra.mxu0 0.0
        %1675 = vmatprep.subr.mxu0 0.0
        %1676 = vmatpush1.msra.mxu0 0.0
        %1677 = vmatprep.subr.mxu0 0.0
        %1678 = vmatpush1.msra.mxu0 0.0
        %1679 = vmatprep.subr.mxu0 0.0
        %1680 = vmatpush1.msra.mxu0 0.0
        %1681 = vmatprep.subr.mxu0 0.0
        %1682 = vmatpush1.msra.mxu0 0.0
        %1683 = vmatprep.subr.mxu0 0.0
        %1684 = vmatpush1.msra.mxu0 0.0
        %1685 = vmatprep.subr.mxu0 0.0
        %1686 = vmatpush1.msra.mxu0 0.0
        %1687 = vmatprep.subr.mxu0 0.0
        %1688 = vmatpush1.msra.mxu0 0.0
        %1689 = vmatprep.subr.mxu0 0.0
        %1690 = vmatpush1.msra.mxu0 0.0
        %1691 = vmatprep.subr.mxu0 0.0
        %1692 = vmatpush1.msra.mxu0 0.0
        %1693 = vmatprep.subr.mxu0 0.0
        %1694 = vmatpush1.msra.mxu0 0.0
        %1695 = vmatprep.subr.mxu0 0.0
        %1696 = vmatpush1.msra.mxu0 0.0
        %1697 = vmatprep.subr.mxu0 0.0
        %1698 = vmatpush1.msra.mxu0 0.0
        %1699 = vmatprep.subr.mxu0 0.0
        %1700 = vmatpush1.msra.mxu0 0.0
        %1701 = vmatprep.subr.mxu0 0.0
        %1702 = vmatpush1.msra.mxu0 0.0
        %1703 = vmatprep.subr.mxu0 0.0
        %1704 = vmatpush1.msra.mxu0 0.0
        %1705 = vmatprep.subr.mxu0 0.0
        %1706 = vmatpush1.msra.mxu0 0.0
        %1707 = vmatprep.mubr.f32.mxu0 0.0
        %v1708 = vand.u32 %v1254, 4294901760
        %1709 = vmatmul.mubr.f32.gmra.mrb[0].mxu0 %v1708
        %v1710 = vpop.f32.mrb[0].mxu0
        %v1711 = vadd.f32 %v1616, %v1710
        %v1712 = vpop.f32.mrb[0].mxu0
        %1713 = vdwg.mxu0
        %1714 = vmatprep.subr.mxu0 0.0
        %v1715 = vand.u32 %v140, 4294901760
        %1716 = vmatpush1.msra.mxu0 %v1715
        %1717 = vmatprep.subr.mxu0 0.0
        %v1718 = vand.u32 %v141, 4294901760
        %1719 = vmatpush1.msra.mxu0 %v1718
        %1720 = vmatprep.subr.mxu0 0.0
        %v1721 = vand.u32 %v142, 4294901760
        %1722 = vmatpush1.msra.mxu0 %v1721
        %1723 = vmatprep.subr.mxu0 0.0
        %v1724 = vand.u32 %v143, 4294901760
        %1725 = vmatpush1.msra.mxu0 %v1724
        %1726 = vmatprep.subr.mxu0 0.0
        %v1727 = vand.u32 %v144, 4294901760
        %1728 = vmatpush1.msra.mxu0 %v1727
        %1729 = vmatprep.subr.mxu0 0.0
        %v1730 = vand.u32 %v145, 4294901760
        %1731 = vmatpush1.msra.mxu0 %v1730
        %1732 = vmatprep.subr.mxu0 0.0
        %v1733 = vand.u32 %v146, 4294901760
        %1734 = vmatpush1.msra.mxu0 %v1733
        %1735 = vmatprep.subr.mxu0 0.0
        %v1736 = vand.u32 %v162, 4294901760
        %1737 = vmatpush1.msra.mxu0 %v1736
        %1738 = vmatprep.subr.mxu0 0.0
        %1739 = vmatpush1.msra.mxu0 0.0
        %1740 = vmatprep.subr.mxu0 0.0
        %1741 = vmatpush1.msra.mxu0 0.0
        %1742 = vmatprep.subr.mxu0 0.0
        %1743 = vmatpush1.msra.mxu0 0.0
        %1744 = vmatprep.subr.mxu0 0.0
        %1745 = vmatpush1.msra.mxu0 0.0
        %1746 = vmatprep.subr.mxu0 0.0
        %1747 = vmatpush1.msra.mxu0 0.0
        %1748 = vmatprep.subr.mxu0 0.0
        %1749 = vmatpush1.msra.mxu0 0.0
        %1750 = vmatprep.subr.mxu0 0.0
        %1751 = vmatpush1.msra.mxu0 0.0
        %1752 = vmatprep.subr.mxu0 0.0
        %1753 = vmatpush1.msra.mxu0 0.0
        %1754 = vmatprep.subr.mxu0 0.0
        %1755 = vmatpush1.msra.mxu0 0.0
        %1756 = vmatprep.subr.mxu0 0.0
        %1757 = vmatpush1.msra.mxu0 0.0
        %1758 = vmatprep.subr.mxu0 0.0
        %1759 = vmatpush1.msra.mxu0 0.0
        %1760 = vmatprep.subr.mxu0 0.0
        %1761 = vmatpush1.msra.mxu0 0.0
        %1762 = vmatprep.subr.mxu0 0.0
        %1763 = vmatpush1.msra.mxu0 0.0
        %1764 = vmatprep.subr.mxu0 0.0
        %1765 = vmatpush1.msra.mxu0 0.0
        %1766 = vmatprep.subr.mxu0 0.0
        %1767 = vmatpush1.msra.mxu0 0.0
        %1768 = vmatprep.subr.mxu0 0.0
        %1769 = vmatpush1.msra.mxu0 0.0
        %1770 = vmatprep.subr.mxu0 0.0
        %1771 = vmatpush1.msra.mxu0 0.0
        %1772 = vmatprep.subr.mxu0 0.0
        %1773 = vmatpush1.msra.mxu0 0.0
        %1774 = vmatprep.subr.mxu0 0.0
        %1775 = vmatpush1.msra.mxu0 0.0
        %1776 = vmatprep.subr.mxu0 0.0
        %1777 = vmatpush1.msra.mxu0 0.0
        %1778 = vmatprep.subr.mxu0 0.0
        %1779 = vmatpush1.msra.mxu0 0.0
        %1780 = vmatprep.subr.mxu0 0.0
        %1781 = vmatpush1.msra.mxu0 0.0
        %1782 = vmatprep.subr.mxu0 0.0
        %1783 = vmatpush1.msra.mxu0 0.0
        %1784 = vmatprep.subr.mxu0 0.0
        %1785 = vmatpush1.msra.mxu0 0.0
        %1786 = vmatprep.mubr.f32.mxu0 0.0
        %v1787 = vand.u32 %v1254, 4294901760
        %1788 = vmatmul.mubr.f32.gmra.mrb[0].mxu0 %v1787
        %v1789 = vpop.f32.mrb[0].mxu0
        %v1790 = vadd.f32 %v1711, %v1789
        %v1791 = vpop.f32.mrb[0].mxu0
        %1792 = vdwg.mxu0
        %1793 = vset.pattern.permute.xlu0 3
        %1794 = vperm.xlu0 %1793, %v139
        %v1795 = vpop.permute.xlu0 %1794
        %vm1796 = vcmp.eq.s32.totalorder %v149, %v1795
        %v1797 = vsel %vm1796, 1, 0
        %v1798 = vcvt.s32.f32 %v1797
        %v1800 = vsel %vm156, %v1798, 0
        %1802 = vmatprep.subr.mxu0 0.0
        %v1803 = vand.u32 %v140, 4294901760
        %1804 = vmatpush1.msra.mxu0 %v1803
        %1805 = vmatprep.subr.mxu0 0.0
        %v1806 = vand.u32 %v141, 4294901760
        %1807 = vmatpush1.msra.mxu0 %v1806
        %1808 = vmatprep.subr.mxu0 0.0
        %v1809 = vand.u32 %v142, 4294901760
        %1810 = vmatpush1.msra.mxu0 %v1809
        %1811 = vmatprep.subr.mxu0 0.0
        %v1812 = vand.u32 %v143, 4294901760
        %1813 = vmatpush1.msra.mxu0 %v1812
        %1814 = vmatprep.subr.mxu0 0.0
        %v1815 = vand.u32 %v144, 4294901760
        %1816 = vmatpush1.msra.mxu0 %v1815
        %1817 = vmatprep.subr.mxu0 0.0
        %v1818 = vand.u32 %v145, 4294901760
        %1819 = vmatpush1.msra.mxu0 %v1818
        %1820 = vmatprep.subr.mxu0 0.0
        %v1821 = vand.u32 %v146, 4294901760
        %1822 = vmatpush1.msra.mxu0 %v1821
        %1823 = vmatprep.subr.mxu0 0.0
        %v1824 = vand.u32 %v162, 4294901760
        %1825 = vmatpush1.msra.mxu0 %v1824
        %1826 = vmatprep.subr.mxu0 0.0
        %1827 = vmatpush1.msra.mxu0 0.0
        %1828 = vmatprep.subr.mxu0 0.0
        %1829 = vmatpush1.msra.mxu0 0.0
        %1830 = vmatprep.subr.mxu0 0.0
        %1831 = vmatpush1.msra.mxu0 0.0
        %1832 = vmatprep.subr.mxu0 0.0
        %1833 = vmatpush1.msra.mxu0 0.0
        %1834 = vmatprep.subr.mxu0 0.0
        %1835 = vmatpush1.msra.mxu0 0.0
        %1836 = vmatprep.subr.mxu0 0.0
        %1837 = vmatpush1.msra.mxu0 0.0
        %1838 = vmatprep.subr.mxu0 0.0
        %1839 = vmatpush1.msra.mxu0 0.0
        %1840 = vmatprep.subr.mxu0 0.0
        %1841 = vmatpush1.msra.mxu0 0.0
        %1842 = vmatprep.subr.mxu0 0.0
        %1843 = vmatpush1.msra.mxu0 0.0
        %1844 = vmatprep.subr.mxu0 0.0
        %1845 = vmatpush1.msra.mxu0 0.0
        %1846 = vmatprep.subr.mxu0 0.0
        %1847 = vmatpush1.msra.mxu0 0.0
        %1848 = vmatprep.subr.mxu0 0.0
        %1849 = vmatpush1.msra.mxu0 0.0
        %1850 = vmatprep.subr.mxu0 0.0
        %1851 = vmatpush1.msra.mxu0 0.0
        %1852 = vmatprep.subr.mxu0 0.0
        %1853 = vmatpush1.msra.mxu0 0.0
        %1854 = vmatprep.subr.mxu0 0.0
        %1855 = vmatpush1.msra.mxu0 0.0
        %1856 = vmatprep.subr.mxu0 0.0
        %1857 = vmatpush1.msra.mxu0 0.0
        %1858 = vmatprep.subr.mxu0 0.0
        %1859 = vmatpush1.msra.mxu0 0.0
        %1860 = vmatprep.subr.mxu0 0.0
        %1861 = vmatpush1.msra.mxu0 0.0
        %1862 = vmatprep.subr.mxu0 0.0
        %1863 = vmatpush1.msra.mxu0 0.0
        %1864 = vmatprep.subr.mxu0 0.0
        %1865 = vmatpush1.msra.mxu0 0.0
        %1866 = vmatprep.subr.mxu0 0.0
        %1867 = vmatpush1.msra.mxu0 0.0
        %1868 = vmatprep.subr.mxu0 0.0
        %1869 = vmatpush1.msra.mxu0 0.0
        %1870 = vmatprep.subr.mxu0 0.0
        %1871 = vmatpush1.msra.mxu0 0.0
        %1872 = vmatprep.subr.mxu0 0.0
        %1873 = vmatpush1.msra.mxu0 0.0
        %1874 = vmatprep.mubr.f32.mxu0 0.0
        %v1875 = vand.u32 %v1800, 4294901760
        %v1876 = vsub.f32 %v1800, %v1875
        %v1877 = vand.u32 %v1876, 4294901760
        %v1878 = vsub.f32 %v1876, %v1877
        %v1879 = vand.u32 %v1878, 4294901760
        %1880 = vmatmul.mubr.f32.gmra.mrb[0].mxu0 %v1879
        %v1881 = vpop.f32.mrb[0].mxu0
        %v1882 = vadd.f32 0.0, %v1881
        %v1883 = vpop.f32.mrb[0].mxu0
        %1884 = vdwg.mxu0
        %1885 = vmatprep.subr.mxu0 0.0
        %v1886 = vand.u32 %v140, 4294901760
        %v1887 = vsub.f32 %v140, %v1886
        %v1888 = vand.u32 %v1887, 4294901760
        %v1889 = vsub.f32 %v1887, %v1888
        %v1890 = vand.u32 %v1889, 4294901760
        %1891 = vmatpush1.msra.mxu0 %v1890
        %1892 = vmatprep.subr.mxu0 0.0
        %v1893 = vand.u32 %v141, 4294901760
        %v1894 = vsub.f32 %v141, %v1893
        %v1895 = vand.u32 %v1894, 4294901760
        %v1896 = vsub.f32 %v1894, %v1895
        %v1897 = vand.u32 %v1896, 4294901760
        %1898 = vmatpush1.msra.mxu0 %v1897
        %1899 = vmatprep.subr.mxu0 0.0
        %v1900 = vand.u32 %v142, 4294901760
        %v1901 = vsub.f32 %v142, %v1900
        %v1902 = vand.u32 %v1901, 4294901760
        %v1903 = vsub.f32 %v1901, %v1902
        %v1904 = vand.u32 %v1903, 4294901760
        %1905 = vmatpush1.msra.mxu0 %v1904
        %1906 = vmatprep.subr.mxu0 0.0
        %v1907 = vand.u32 %v143, 4294901760
        %v1908 = vsub.f32 %v143, %v1907
        %v1909 = vand.u32 %v1908, 4294901760
        %v1910 = vsub.f32 %v1908, %v1909
        %v1911 = vand.u32 %v1910, 4294901760
        %1912 = vmatpush1.msra.mxu0 %v1911
        %1913 = vmatprep.subr.mxu0 0.0
        %v1914 = vand.u32 %v144, 4294901760
        %v1915 = vsub.f32 %v144, %v1914
        %v1916 = vand.u32 %v1915, 4294901760
        %v1917 = vsub.f32 %v1915, %v1916
        %v1918 = vand.u32 %v1917, 4294901760
        %1919 = vmatpush1.msra.mxu0 %v1918
        %1920 = vmatprep.subr.mxu0 0.0
        %v1921 = vand.u32 %v145, 4294901760
        %v1922 = vsub.f32 %v145, %v1921
        %v1923 = vand.u32 %v1922, 4294901760
        %v1924 = vsub.f32 %v1922, %v1923
        %v1925 = vand.u32 %v1924, 4294901760
        %1926 = vmatpush1.msra.mxu0 %v1925
        %1927 = vmatprep.subr.mxu0 0.0
        %v1928 = vand.u32 %v146, 4294901760
        %v1929 = vsub.f32 %v146, %v1928
        %v1930 = vand.u32 %v1929, 4294901760
        %v1931 = vsub.f32 %v1929, %v1930
        %v1932 = vand.u32 %v1931, 4294901760
        %1933 = vmatpush1.msra.mxu0 %v1932
        %1934 = vmatprep.subr.mxu0 0.0
        %v1935 = vand.u32 %v162, 4294901760
        %v1936 = vsub.f32 %v162, %v1935
        %v1937 = vand.u32 %v1936, 4294901760
        %v1938 = vsub.f32 %v1936, %v1937
        %v1939 = vand.u32 %v1938, 4294901760
        %1940 = vmatpush1.msra.mxu0 %v1939
        %1941 = vmatprep.subr.mxu0 0.0
        %1942 = vmatpush1.msra.mxu0 0.0
        %1943 = vmatprep.subr.mxu0 0.0
        %1944 = vmatpush1.msra.mxu0 0.0
        %1945 = vmatprep.subr.mxu0 0.0
        %1946 = vmatpush1.msra.mxu0 0.0
        %1947 = vmatprep.subr.mxu0 0.0
        %1948 = vmatpush1.msra.mxu0 0.0
        %1949 = vmatprep.subr.mxu0 0.0
        %1950 = vmatpush1.msra.mxu0 0.0
        %1951 = vmatprep.subr.mxu0 0.0
        %1952 = vmatpush1.msra.mxu0 0.0
        %1953 = vmatprep.subr.mxu0 0.0
        %1954 = vmatpush1.msra.mxu0 0.0
        %1955 = vmatprep.subr.mxu0 0.0
        %1956 = vmatpush1.msra.mxu0 0.0
        %1957 = vmatprep.subr.mxu0 0.0
        %1958 = vmatpush1.msra.mxu0 0.0
        %1959 = vmatprep.subr.mxu0 0.0
        %1960 = vmatpush1.msra.mxu0 0.0
        %1961 = vmatprep.subr.mxu0 0.0
        %1962 = vmatpush1.msra.mxu0 0.0
        %1963 = vmatprep.subr.mxu0 0.0
        %1964 = vmatpush1.msra.mxu0 0.0
        %1965 = vmatprep.subr.mxu0 0.0
        %1966 = vmatpush1.msra.mxu0 0.0
        %1967 = vmatprep.subr.mxu0 0.0
        %1968 = vmatpush1.msra.mxu0 0.0
        %1969 = vmatprep.subr.mxu0 0.0
        %1970 = vmatpush1.msra.mxu0 0.0
        %1971 = vmatprep.subr.mxu0 0.0
        %1972 = vmatpush1.msra.mxu0 0.0
        %1973 = vmatprep.subr.mxu0 0.0
        %1974 = vmatpush1.msra.mxu0 0.0
        %1975 = vmatprep.subr.mxu0 0.0
        %1976 = vmatpush1.msra.mxu0 0.0
        %1977 = vmatprep.subr.mxu0 0.0
        %1978 = vmatpush1.msra.mxu0 0.0
        %1979 = vmatprep.subr.mxu0 0.0
        %1980 = vmatpush1.msra.mxu0 0.0
        %1981 = vmatprep.subr.mxu0 0.0
        %1982 = vmatpush1.msra.mxu0 0.0
        %1983 = vmatprep.subr.mxu0 0.0
        %1984 = vmatpush1.msra.mxu0 0.0
        %1985 = vmatprep.subr.mxu0 0.0
        %1986 = vmatpush1.msra.mxu0 0.0
        %1987 = vmatprep.subr.mxu0 0.0
        %1988 = vmatpush1.msra.mxu0 0.0
        %1989 = vmatprep.mubr.f32.mxu0 0.0
        %v1990 = vand.u32 %v1800, 4294901760
        %1991 = vmatmul.mubr.f32.gmra.mrb[0].mxu0 %v1990
        %v1992 = vpop.f32.mrb[0].mxu0
        %v1993 = vadd.f32 %v1882, %v1992
        %v1994 = vpop.f32.mrb[0].mxu0
        %1995 = vdwg.mxu0
        %1996 = vmatprep.subr.mxu0 0.0
        %v1997 = vand.u32 %v140, 4294901760
        %v1998 = vsub.f32 %v140, %v1997
        %1999 = vmatpush1.msra.mxu0 %v1998
        %2000 = vmatprep.subr.mxu0 0.0
        %v2001 = vand.u32 %v141, 4294901760
        %v2002 = vsub.f32 %v141, %v2001
        %2003 = vmatpush1.msra.mxu0 %v2002
        %2004 = vmatprep.subr.mxu0 0.0
        %v2005 = vand.u32 %v142, 4294901760
        %v2006 = vsub.f32 %v142, %v2005
        %2007 = vmatpush1.msra.mxu0 %v2006
        %2008 = vmatprep.subr.mxu0 0.0
        %v2009 = vand.u32 %v143, 4294901760
        %v2010 = vsub.f32 %v143, %v2009
        %2011 = vmatpush1.msra.mxu0 %v2010
        %2012 = vmatprep.subr.mxu0 0.0
        %v2013 = vand.u32 %v144, 4294901760
        %v2014 = vsub.f32 %v144, %v2013
        %2015 = vmatpush1.msra.mxu0 %v2014
        %2016 = vmatprep.subr.mxu0 0.0
        %v2017 = vand.u32 %v145, 4294901760
        %v2018 = vsub.f32 %v145, %v2017
        %2019 = vmatpush1.msra.mxu0 %v2018
        %2020 = vmatprep.subr.mxu0 0.0
        %v2021 = vand.u32 %v146, 4294901760
        %v2022 = vsub.f32 %v146, %v2021
        %2023 = vmatpush1.msra.mxu0 %v2022
        %2024 = vmatprep.subr.mxu0 0.0
        %v2025 = vand.u32 %v162, 4294901760
        %v2026 = vsub.f32 %v162, %v2025
        %2027 = vmatpush1.msra.mxu0 %v2026
        %2028 = vmatprep.subr.mxu0 0.0
        %2029 = vmatpush1.msra.mxu0 0.0
        %2030 = vmatprep.subr.mxu0 0.0
        %2031 = vmatpush1.msra.mxu0 0.0
        %2032 = vmatprep.subr.mxu0 0.0
        %2033 = vmatpush1.msra.mxu0 0.0
        %2034 = vmatprep.subr.mxu0 0.0
        %2035 = vmatpush1.msra.mxu0 0.0
        %2036 = vmatprep.subr.mxu0 0.0
        %2037 = vmatpush1.msra.mxu0 0.0
        %2038 = vmatprep.subr.mxu0 0.0
        %2039 = vmatpush1.msra.mxu0 0.0
        %2040 = vmatprep.subr.mxu0 0.0
        %2041 = vmatpush1.msra.mxu0 0.0
        %2042 = vmatprep.subr.mxu0 0.0
        %2043 = vmatpush1.msra.mxu0 0.0
        %2044 = vmatprep.subr.mxu0 0.0
        %2045 = vmatpush1.msra.mxu0 0.0
        %2046 = vmatprep.subr.mxu0 0.0
        %2047 = vmatpush1.msra.mxu0 0.0
        %2048 = vmatprep.subr.mxu0 0.0
        %2049 = vmatpush1.msra.mxu0 0.0
        %2050 = vmatprep.subr.mxu0 0.0
        %2051 = vmatpush1.msra.mxu0 0.0
        %2052 = vmatprep.subr.mxu0 0.0
        %2053 = vmatpush1.msra.mxu0 0.0
        %2054 = vmatprep.subr.mxu0 0.0
        %2055 = vmatpush1.msra.mxu0 0.0
        %2056 = vmatprep.subr.mxu0 0.0
        %2057 = vmatpush1.msra.mxu0 0.0
        %2058 = vmatprep.subr.mxu0 0.0
        %2059 = vmatpush1.msra.mxu0 0.0
        %2060 = vmatprep.subr.mxu0 0.0
        %2061 = vmatpush1.msra.mxu0 0.0
        %2062 = vmatprep.subr.mxu0 0.0
        %2063 = vmatpush1.msra.mxu0 0.0
        %2064 = vmatprep.subr.mxu0 0.0
        %2065 = vmatpush1.msra.mxu0 0.0
        %2066 = vmatprep.subr.mxu0 0.0
        %2067 = vmatpush1.msra.mxu0 0.0
        %2068 = vmatprep.subr.mxu0 0.0
        %2069 = vmatpush1.msra.mxu0 0.0
        %2070 = vmatprep.subr.mxu0 0.0
        %2071 = vmatpush1.msra.mxu0 0.0
        %2072 = vmatprep.subr.mxu0 0.0
        %2073 = vmatpush1.msra.mxu0 0.0
        %2074 = vmatprep.subr.mxu0 0.0
        %2075 = vmatpush1.msra.mxu0 0.0
        %2076 = vmatprep.mubr.f32.mxu0 0.0
        %v2077 = vand.u32 %v1800, 4294901760
        %v2078 = vsub.f32 %v1800, %v2077
        %2079 = vmatmul.mubr.f32.gmra.mrb[0].mxu0 %v2078
        %v2080 = vpop.f32.mrb[0].mxu0
        %v2081 = vadd.f32 %v1993, %v2080
        %v2082 = vpop.f32.mrb[0].mxu0
        %2083 = vdwg.mxu0
        %2084 = vmatprep.subr.mxu0 0.0
        %v2085 = vand.u32 %v140, 4294901760
        %2086 = vmatpush1.msra.mxu0 %v2085
        %2087 = vmatprep.subr.mxu0 0.0
        %v2088 = vand.u32 %v141, 4294901760
        %2089 = vmatpush1.msra.mxu0 %v2088
        %2090 = vmatprep.subr.mxu0 0.0
        %v2091 = vand.u32 %v142, 4294901760
        %2092 = vmatpush1.msra.mxu0 %v2091
        %2093 = vmatprep.subr.mxu0 0.0
        %v2094 = vand.u32 %v143, 4294901760
        %2095 = vmatpush1.msra.mxu0 %v2094
        %2096 = vmatprep.subr.mxu0 0.0
        %v2097 = vand.u32 %v144, 4294901760
        %2098 = vmatpush1.msra.mxu0 %v2097
        %2099 = vmatprep.subr.mxu0 0.0
        %v2100 = vand.u32 %v145, 4294901760
        %2101 = vmatpush1.msra.mxu0 %v2100
        %2102 = vmatprep.subr.mxu0 0.0
        %v2103 = vand.u32 %v146, 4294901760
        %2104 = vmatpush1.msra.mxu0 %v2103
        %2105 = vmatprep.subr.mxu0 0.0
        %v2106 = vand.u32 %v162, 4294901760
        %2107 = vmatpush1.msra.mxu0 %v2106
        %2108 = vmatprep.subr.mxu0 0.0
        %2109 = vmatpush1.msra.mxu0 0.0
        %2110 = vmatprep.subr.mxu0 0.0
        %2111 = vmatpush1.msra.mxu0 0.0
        %2112 = vmatprep.subr.mxu0 0.0
        %2113 = vmatpush1.msra.mxu0 0.0
        %2114 = vmatprep.subr.mxu0 0.0
        %2115 = vmatpush1.msra.mxu0 0.0
        %2116 = vmatprep.subr.mxu0 0.0
        %2117 = vmatpush1.msra.mxu0 0.0
        %2118 = vmatprep.subr.mxu0 0.0
        %2119 = vmatpush1.msra.mxu0 0.0
        %2120 = vmatprep.subr.mxu0 0.0
        %2121 = vmatpush1.msra.mxu0 0.0
        %2122 = vmatprep.subr.mxu0 0.0
        %2123 = vmatpush1.msra.mxu0 0.0
        %2124 = vmatprep.subr.mxu0 0.0
        %2125 = vmatpush1.msra.mxu0 0.0
        %2126 = vmatprep.subr.mxu0 0.0
        %2127 = vmatpush1.msra.mxu0 0.0
        %2128 = vmatprep.subr.mxu0 0.0
        %2129 = vmatpush1.msra.mxu0 0.0
        %2130 = vmatprep.subr.mxu0 0.0
        %2131 = vmatpush1.msra.mxu0 0.0
        %2132 = vmatprep.subr.mxu0 0.0
        %2133 = vmatpush1.msra.mxu0 0.0
        %2134 = vmatprep.subr.mxu0 0.0
        %2135 = vmatpush1.msra.mxu0 0.0
        %2136 = vmatprep.subr.mxu0 0.0
        %2137 = vmatpush1.msra.mxu0 0.0
        %2138 = vmatprep.subr.mxu0 0.0
        %2139 = vmatpush1.msra.mxu0 0.0
        %2140 = vmatprep.subr.mxu0 0.0
        %2141 = vmatpush1.msra.mxu0 0.0
        %2142 = vmatprep.subr.mxu0 0.0
        %2143 = vmatpush1.msra.mxu0 0.0
        %2144 = vmatprep.subr.mxu0 0.0
        %2145 = vmatpush1.msra.mxu0 0.0
        %2146 = vmatprep.subr.mxu0 0.0
        %2147 = vmatpush1.msra.mxu0 0.0
        %2148 = vmatprep.subr.mxu0 0.0
        %2149 = vmatpush1.msra.mxu0 0.0
        %2150 = vmatprep.subr.mxu0 0.0
        %2151 = vmatpush1.msra.mxu0 0.0
        %2152 = vmatprep.subr.mxu0 0.0
        %2153 = vmatpush1.msra.mxu0 0.0
        %2154 = vmatprep.subr.mxu0 0.0
        %2155 = vmatpush1.msra.mxu0 0.0
        %2156 = vmatprep.mubr.f32.mxu0 0.0
        %v2157 = vand.u32 %v1800, 4294901760
        %v2158 = vsub.f32 %v1800, %v2157
        %v2159 = vand.u32 %v2158, 4294901760
        %2160 = vmatmul.mubr.f32.gmra.mrb[0].mxu0 %v2159
        %v2161 = vpop.f32.mrb[0].mxu0
        %v2162 = vadd.f32 %v2081, %v2161
        %v2163 = vpop.f32.mrb[0].mxu0
        %2164 = vdwg.mxu0
        %2165 = vmatprep.subr.mxu0 0.0
        %v2166 = vand.u32 %v140, 4294901760
        %v2167 = vsub.f32 %v140, %v2166
        %v2168 = vand.u32 %v2167, 4294901760
        %2169 = vmatpush1.msra.mxu0 %v2168
        %2170 = vmatprep.subr.mxu0 0.0
        %v2171 = vand.u32 %v141, 4294901760
        %v2172 = vsub.f32 %v141, %v2171
        %v2173 = vand.u32 %v2172, 4294901760
        %2174 = vmatpush1.msra.mxu0 %v2173
        %2175 = vmatprep.subr.mxu0 0.0
        %v2176 = vand.u32 %v142, 4294901760
        %v2177 = vsub.f32 %v142, %v2176
        %v2178 = vand.u32 %v2177, 4294901760
        %2179 = vmatpush1.msra.mxu0 %v2178
        %2180 = vmatprep.subr.mxu0 0.0
        %v2181 = vand.u32 %v143, 4294901760
        %v2182 = vsub.f32 %v143, %v2181
        %v2183 = vand.u32 %v2182, 4294901760
        %2184 = vmatpush1.msra.mxu0 %v2183
        %2185 = vmatprep.subr.mxu0 0.0
        %v2186 = vand.u32 %v144, 4294901760
        %v2187 = vsub.f32 %v144, %v2186
        %v2188 = vand.u32 %v2187, 4294901760
        %2189 = vmatpush1.msra.mxu0 %v2188
        %2190 = vmatprep.subr.mxu0 0.0
        %v2191 = vand.u32 %v145, 4294901760
        %v2192 = vsub.f32 %v145, %v2191
        %v2193 = vand.u32 %v2192, 4294901760
        %2194 = vmatpush1.msra.mxu0 %v2193
        %2195 = vmatprep.subr.mxu0 0.0
        %v2196 = vand.u32 %v146, 4294901760
        %v2197 = vsub.f32 %v146, %v2196
        %v2198 = vand.u32 %v2197, 4294901760
        %2199 = vmatpush1.msra.mxu0 %v2198
        %2200 = vmatprep.subr.mxu0 0.0
        %v2201 = vand.u32 %v162, 4294901760
        %v2202 = vsub.f32 %v162, %v2201
        %v2203 = vand.u32 %v2202, 4294901760
        %2204 = vmatpush1.msra.mxu0 %v2203
        %2205 = vmatprep.subr.mxu0 0.0
        %2206 = vmatpush1.msra.mxu0 0.0
        %2207 = vmatprep.subr.mxu0 0.0
        %2208 = vmatpush1.msra.mxu0 0.0
        %2209 = vmatprep.subr.mxu0 0.0
        %2210 = vmatpush1.msra.mxu0 0.0
        %2211 = vmatprep.subr.mxu0 0.0
        %2212 = vmatpush1.msra.mxu0 0.0
        %2213 = vmatprep.subr.mxu0 0.0
        %2214 = vmatpush1.msra.mxu0 0.0
        %2215 = vmatprep.subr.mxu0 0.0
        %2216 = vmatpush1.msra.mxu0 0.0
        %2217 = vmatprep.subr.mxu0 0.0
        %2218 = vmatpush1.msra.mxu0 0.0
        %2219 = vmatprep.subr.mxu0 0.0
        %2220 = vmatpush1.msra.mxu0 0.0
        %2221 = vmatprep.subr.mxu0 0.0
        %2222 = vmatpush1.msra.mxu0 0.0
        %2223 = vmatprep.subr.mxu0 0.0
        %2224 = vmatpush1.msra.mxu0 0.0
        %2225 = vmatprep.subr.mxu0 0.0
        %2226 = vmatpush1.msra.mxu0 0.0
        %2227 = vmatprep.subr.mxu0 0.0
        %2228 = vmatpush1.msra.mxu0 0.0
        %2229 = vmatprep.subr.mxu0 0.0
        %2230 = vmatpush1.msra.mxu0 0.0
        %2231 = vmatprep.subr.mxu0 0.0
        %2232 = vmatpush1.msra.mxu0 0.0
        %2233 = vmatprep.subr.mxu0 0.0
        %2234 = vmatpush1.msra.mxu0 0.0
        %2235 = vmatprep.subr.mxu0 0.0
        %2236 = vmatpush1.msra.mxu0 0.0
        %2237 = vmatprep.subr.mxu0 0.0
        %2238 = vmatpush1.msra.mxu0 0.0
        %2239 = vmatprep.subr.mxu0 0.0
        %2240 = vmatpush1.msra.mxu0 0.0
        %2241 = vmatprep.subr.mxu0 0.0
        %2242 = vmatpush1.msra.mxu0 0.0
        %2243 = vmatprep.subr.mxu0 0.0
        %2244 = vmatpush1.msra.mxu0 0.0
        %2245 = vmatprep.subr.mxu0 0.0
        %2246 = vmatpush1.msra.mxu0 0.0
        %2247 = vmatprep.subr.mxu0 0.0
        %2248 = vmatpush1.msra.mxu0 0.0
        %2249 = vmatprep.subr.mxu0 0.0
        %2250 = vmatpush1.msra.mxu0 0.0
        %2251 = vmatprep.subr.mxu0 0.0
        %2252 = vmatpush1.msra.mxu0 0.0
        %2253 = vmatprep.mubr.f32.mxu0 0.0
        %v2254 = vand.u32 %v1800, 4294901760
        %2255 = vmatmul.mubr.f32.gmra.mrb[0].mxu0 %v2254
        %v2256 = vpop.f32.mrb[0].mxu0
        %v2257 = vadd.f32 %v2162, %v2256
        %v2258 = vpop.f32.mrb[0].mxu0
        %2259 = vdwg.mxu0
        %2260 = vmatprep.subr.mxu0 0.0
        %v2261 = vand.u32 %v140, 4294901760
        %2262 = vmatpush1.msra.mxu0 %v2261
        %2263 = vmatprep.subr.mxu0 0.0
        %v2264 = vand.u32 %v141, 4294901760
        %2265 = vmatpush1.msra.mxu0 %v2264
        %2266 = vmatprep.subr.mxu0 0.0
        %v2267 = vand.u32 %v142, 4294901760
        %2268 = vmatpush1.msra.mxu0 %v2267
        %2269 = vmatprep.subr.mxu0 0.0
        %v2270 = vand.u32 %v143, 4294901760
        %2271 = vmatpush1.msra.mxu0 %v2270
        %2272 = vmatprep.subr.mxu0 0.0
        %v2273 = vand.u32 %v144, 4294901760
        %2274 = vmatpush1.msra.mxu0 %v2273
        %2275 = vmatprep.subr.mxu0 0.0
        %v2276 = vand.u32 %v145, 4294901760
        %2277 = vmatpush1.msra.mxu0 %v2276
        %2278 = vmatprep.subr.mxu0 0.0
        %v2279 = vand.u32 %v146, 4294901760
        %2280 = vmatpush1.msra.mxu0 %v2279
        %2281 = vmatprep.subr.mxu0 0.0
        %v2282 = vand.u32 %v162, 4294901760
        %2283 = vmatpush1.msra.mxu0 %v2282
        %2284 = vmatprep.subr.mxu0 0.0
        %2285 = vmatpush1.msra.mxu0 0.0
        %2286 = vmatprep.subr.mxu0 0.0
        %2287 = vmatpush1.msra.mxu0 0.0
        %2288 = vmatprep.subr.mxu0 0.0
        %2289 = vmatpush1.msra.mxu0 0.0
        %2290 = vmatprep.subr.mxu0 0.0
        %2291 = vmatpush1.msra.mxu0 0.0
        %2292 = vmatprep.subr.mxu0 0.0
        %2293 = vmatpush1.msra.mxu0 0.0
        %2294 = vmatprep.subr.mxu0 0.0
        %2295 = vmatpush1.msra.mxu0 0.0
        %2296 = vmatprep.subr.mxu0 0.0
        %2297 = vmatpush1.msra.mxu0 0.0
        %2298 = vmatprep.subr.mxu0 0.0
        %2299 = vmatpush1.msra.mxu0 0.0
        %2300 = vmatprep.subr.mxu0 0.0
        %2301 = vmatpush1.msra.mxu0 0.0
        %2302 = vmatprep.subr.mxu0 0.0
        %2303 = vmatpush1.msra.mxu0 0.0
        %2304 = vmatprep.subr.mxu0 0.0
        %2305 = vmatpush1.msra.mxu0 0.0
        %2306 = vmatprep.subr.mxu0 0.0
        %2307 = vmatpush1.msra.mxu0 0.0
        %2308 = vmatprep.subr.mxu0 0.0
        %2309 = vmatpush1.msra.mxu0 0.0
        %2310 = vmatprep.subr.mxu0 0.0
        %2311 = vmatpush1.msra.mxu0 0.0
        %2312 = vmatprep.subr.mxu0 0.0
        %2313 = vmatpush1.msra.mxu0 0.0
        %2314 = vmatprep.subr.mxu0 0.0
        %2315 = vmatpush1.msra.mxu0 0.0
        %2316 = vmatprep.subr.mxu0 0.0
        %2317 = vmatpush1.msra.mxu0 0.0
        %2318 = vmatprep.subr.mxu0 0.0
        %2319 = vmatpush1.msra.mxu0 0.0
        %2320 = vmatprep.subr.mxu0 0.0
        %2321 = vmatpush1.msra.mxu0 0.0
        %2322 = vmatprep.subr.mxu0 0.0
        %2323 = vmatpush1.msra.mxu0 0.0
        %2324 = vmatprep.subr.mxu0 0.0
        %2325 = vmatpush1.msra.mxu0 0.0
        %2326 = vmatprep.subr.mxu0 0.0
        %2327 = vmatpush1.msra.mxu0 0.0
        %2328 = vmatprep.subr.mxu0 0.0
        %2329 = vmatpush1.msra.mxu0 0.0
        %2330 = vmatprep.subr.mxu0 0.0
        %2331 = vmatpush1.msra.mxu0 0.0
        %2332 = vmatprep.mubr.f32.mxu0 0.0
        %v2333 = vand.u32 %v1800, 4294901760
        %2334 = vmatmul.mubr.f32.gmra.mrb[0].mxu0 %v2333
        %v2335 = vpop.f32.mrb[0].mxu0
        %v2336 = vadd.f32 %v2257, %v2335
        %v2337 = vpop.f32.mrb[0].mxu0
        %2338 = vdwg.mxu0
        %2340 = vrot.lane.b32.xlu0 %v1244, 32
        %v2341 = vpop.permute.xlu0 %2340
        %2344 = vrot.lane.b32.xlu0 %v1790, 64
        %v2345 = vpop.permute.xlu0 %2344
        %2348 = vrot.lane.b32.xlu0 %v2336, 96
        %v2349 = vpop.permute.xlu0 %2348
        %vm2351 = vcmask 261120
        %v2352 = vsel %vm2351, %v698, %v2341
        %vm2353 = vcmask 523264
        %v2354 = vsel %vm2353, %v2352, %v2345
        %vm2355 = vcmask 785408
        %v2356 = vsel %vm2355, %v2354, %v2349
        %2357 = vst [vmem:[%s134] sm:$0xff] %v2356
        %s2358 = sand.u32 %s71, 1
        %s2359 = scalar_lea.sflag [#allocation3], %s2358
        %s2360 = sand.u32 %s71, 1
        %s2361 = smul.addr %s2360, 8
        %s2362 = scalar_lea.vmem [#allocation2], %s2361
        // Predicated region
        $region29: #{tpu_custom_call.1} parent=27 // pred_check
          %p2363 = pneg %p81
        $region30: #{tpu_custom_call.1} parent=27 // pred_check_branch
          %2365 = sbr.rel (%p2363) target = $region32
        $region31: #{tpu_custom_call.1} parent=27 // pred_region
          %s2367 = ssub.s32 128, 128
          %2368 = vsyncadd %s2359, %s2367
          %s2369 = smul.addr %s16, 128
          %s2370 = scalar_lea.hbm %s2, %s2369
          %s2372 = sshll.u32 %s2362, 4
          %s2373 = int_to_ptr.vmem [resolvable:$true] %s2372
          %2375 = dma.vmem_to_hbm [thread:$0]  %s2373, 128, %s2370, %s2359
        $region32: #{tpu_custom_call.1} parent=27 // pred_fallthru
          _
      $region28: #{tpu_custom_call.1} parent=5 // pred_fallthru
        _
      %p2376 = scmp.le.s32.totalorder 2, %s11
      // Predicated region
      $region33: #{tpu_custom_call.1} parent=5 // pred_check
        %p2377 = pneg %p2376
      $region34: #{tpu_custom_call.1} parent=5 // pred_check_branch
        %2379 = sbr.rel (%p2377) target = $region36
      $region35: #{tpu_custom_call.1} parent=5 // pred_region
        %s2380 = ssub.s32 %s11, 2
        // Predicated region
        $region37: #{tpu_custom_call.1} parent=35 // pred_check
          %p2381 = pneg %p87
        $region38: #{tpu_custom_call.1} parent=35 // pred_check_branch
          %2383 = sbr.rel (%p2381) target = $region40
        $region39: #{tpu_custom_call.1} parent=35 // pred_region
          %s2384 = sand.u32 %s72, 1
          %s2385 = scalar_lea.sflag [#allocation3], %s2384
          %s2386 = sand.u32 %s72, 1
          %s2387 = smul.addr %s2386, 8
          %s2388 = scalar_lea.vmem [#allocation2], %s2387
          %2389 = dma.done %s2385, 128
        $region40: #{tpu_custom_call.1} parent=35 // pred_fallthru
          _
      $region36: #{tpu_custom_call.1} parent=5 // pred_fallthru
        _
    $region6: #{tpu_custom_call.1} parent=1 // loop_footer
      %s15 = sadd.s32 1, %s11
    $region7: #{tpu_custom_call.1} parent=1 // loop_footer_branch
      %10 = sbr.rel target = $region3
    $region8: #{tpu_custom_call.1} parent=1 // loop_exit
      _
    %2390 = vsyncpa [#allocation3], 1
    %s2391 = scalar_lea.sflag [#allocation3], 1
    %2392 = vsyncpa %s2391, 1

</llo_original>
